<compile_context>
chip_gen: v5e
topology: v5e:2x2
jax: 0.10.0
libtpu: 0.0.40
codegen_flags: <defaults>
</compile_context>

<pallas_src>
import functools

import numpy as np

import jax
import jax.numpy as jnp
from jax.experimental import pallas as pl
from jax.experimental.pallas import tpu as pltpu

# ----------------------------- problem sizes -----------------------------
B = 2          # batch
C_IN = 4       # input channels
H = W = 16     # input spatial
C_FEAT = 8     # encoder output channels
K = 4          # conv kernel size
STRIDE = 2
PAD = 1
H_F = W_F = H // STRIDE          # 8x8 feature map
N_FEATURES = C_FEAT * H_F * W_F  # 512
N_IN = C_IN * H * W              # 1024
Z_DIM = 16


def _round_up(n, m):
    return ((n + m - 1) // m) * m


# ------------------------- fused Pallas kernel ----------------------------

def _vae_fused_kernel(x_ref, eps_ref, aenc_ref, benc_ref, wml_ref, bml_ref,
                      mzd_ref, bzd_ref, xrec_ref, ml_ref):
    """One batch chunk of the VAE forward; weights are grid-resident in VMEM.

    x_ref    : (BM, C_IN*H*W)       bf16  NCHW-flattened input chunk
    eps_ref  : (BM, Z_DIM)          f32   reparameterization noise chunk
    aenc_ref : (C_IN*H*W, N_FEAT)   bf16  Conv2d folded to a dense matrix
    benc_ref : (1, N_FEAT)          f32   per-channel conv bias, broadcast
    wml_ref  : (N_FEAT, 2*Z_DIM)    bf16  [W_mu^T | W_log_var^T]
    bml_ref  : (1, 2*Z_DIM)         f32
    mzd_ref  : (Z_DIM, C_IN*H*W)    bf16  trans Linear composed with ConvT
    bzd_ref  : (1, C_IN*H*W)        f32
    xrec_ref : (BM, C_IN*H*W)       f32   tanh(reconstruction)
    ml_ref   : (BM, 2*Z_DIM)        f32   [mu | log_var] (single dense store)
    """
    # ---- features_encoder: Conv2d(k=4, s=2, p=1) as one lane-dense GEMM + ReLU
    h = jnp.dot(x_ref[...], aenc_ref[...],
                preferred_element_type=jnp.float32) + benc_ref[...]
    h = jnp.maximum(h, 0.0)                              # ReLU (f32, VPU)

    # ---- mu / log_var: one fused GEMM, written once as a single output
    ml = jnp.dot(h.astype(jnp.bfloat16), wml_ref[...],
                 preferred_element_type=jnp.float32) + bml_ref[...]
    mu = ml[:, :Z_DIM]
    log_var = ml[:, Z_DIM:]

    # ---- reparameterization (f32 element-wise; exp on the EUP)
    z = mu + jnp.exp(0.5 * log_var) * eps_ref[...]

    # ---- trans Linear + ConvTranspose2d (folded), then tanh
    xr = jnp.dot(z.astype(jnp.bfloat16), mzd_ref[...],
                 preferred_element_type=jnp.float32) + bzd_ref[...]
    xrec_ref[...] = jnp.tanh(xr)
    ml_ref[...] = ml


def vae_forward(x, prep, eps, *, block_batch=256):
    """Returns (x_rec, mu, log_sigma2) exactly like VAE.forward.

    x:   (B, C_IN, H, W) f32
    eps: (B, Z_DIM) f32   (torch.randn_like(mu) equivalent, functionalized)
    """
    bb = x.shape[0]
    bm = min(_round_up(block_batch, 8), _round_up(bb, 8))   # rows per grid step
    b_pad = _round_up(bb, bm)
    n_steps = b_pad // bm

    # free metadata reshape (NCHW flatten) + bf16 cast for the MXU
    x_flat = x.reshape(bb, N_IN).astype(jnp.bfloat16)
    if b_pad != bb:
        x_flat = jnp.pad(x_flat, ((0, b_pad - bb), (0, 0)))
        eps_p = jnp.pad(eps, ((0, b_pad - bb), (0, 0)))
    else:
        eps_p = eps

    xr_flat, ml = pl.pallas_call(
        _vae_fused_kernel,
        out_shape=(jax.ShapeDtypeStruct((b_pad, N_IN), jnp.float32),
                   jax.ShapeDtypeStruct((b_pad, 2 * Z_DIM), jnp.float32)),
        grid=(n_steps,),
        in_specs=[
            # pipelined per-chunk inputs
            pl.BlockSpec((bm, N_IN), lambda i: (i, 0)),          # x chunk
            pl.BlockSpec((bm, Z_DIM), lambda i: (i, 0)),         # eps chunk
            # weights: constant block index -> DMA'd once, VMEM-resident
            pl.BlockSpec((N_IN, N_FEATURES), lambda i: (0, 0)),  # A_enc
            pl.BlockSpec((1, N_FEATURES), lambda i: (0, 0)),     # b_enc
            pl.BlockSpec((N_FEATURES, 2 * Z_DIM), lambda i: (0, 0)),  # W_ml
            pl.BlockSpec((1, 2 * Z_DIM), lambda i: (0, 0)),      # b_ml
            pl.BlockSpec((Z_DIM, N_IN), lambda i: (0, 0)),       # M_zdec
            pl.BlockSpec((1, N_IN), lambda i: (0, 0)),           # b_zdec
        ],
        out_specs=(
            pl.BlockSpec((bm, N_IN), lambda i: (i, 0)),          # x_rec chunk
            pl.BlockSpec((bm, 2 * Z_DIM), lambda i: (i, 0)),     # [mu|log_var]
        ),
        compiler_params=pltpu.CompilerParams(
            dimension_semantics=("parallel",)),   # v7x: split chunks over TCs
    )(x_flat, eps_p, prep["A_enc"], prep["b_enc"], prep["W_ml"], prep["b_ml"],
      prep["M_zdec"], prep["b_zdec"])

    x_rec = xr_flat[:bb].reshape(bb, C_IN, H, W)
    mu = ml[:bb, :Z_DIM]
    log_sigma2 = ml[:bb, Z_DIM:]
    return x_rec, mu, log_sigma2


# ----------------- one-time parameter preprocessing (hoisted) --------------

def conv2d_to_dense(w, b, h_in, w_in, stride, pad):
    """Fold Conv2d(Ci->Co, KxK, stride, pad) into y_flat = x_flat @ A + b_full,
    with both sides in NCHW-flatten order."""
    co, ci, kh, kw = w.shape
    h_out = (h_in + 2 * pad - kh) // stride + 1
    w_out = (w_in + 2 * pad - kw) // stride + 1
    A = np.zeros((ci, h_in, w_in, co, h_out, w_out), np.float64)
    for ki in range(kh):
        for kj in range(kw):
            for oh in range(h_out):
                ih = stride * oh + ki - pad
                if ih < 0 or ih >= h_in:
                    continue
                for ow in range(w_out):
                    iw = stride * ow + kj - pad
                    if iw < 0 or iw >= w_in:
                        continue
                    A[:, ih, iw, :, oh, ow] += w[:, :, ki, kj].T  # (Ci, Co)
    return (A.reshape(ci * h_in * w_in, co * h_out * w_out),
            np.repeat(b, h_out * w_out))


def convT2d_to_dense(w, b, h_in, w_in, stride, pad):
    """Fold ConvTranspose2d(Ci->Co, KxK, stride, pad) into
    y_flat = x_flat @ A + b_full, NCHW-flatten order on both sides."""
    ci, co, kh, kw = w.shape
    h_out = (h_in - 1) * stride - 2 * pad + kh
    w_out = (w_in - 1) * stride - 2 * pad + kw
    A = np.zeros((ci, h_in, w_in, co, h_out, w_out), np.float64)
    for ki in range(kh):
        for kj in range(kw):
            for ih in range(h_in):
                oh = stride * ih + ki - pad
                if oh < 0 or oh >= h_out:
                    continue
                for iw in range(w_in):
                    ow = stride * iw + kj - pad
                    if ow < 0 or ow >= w_out:
                        continue
                    A[:, ih, iw, :, oh, ow] += w[:, :, ki, kj]    # (Ci, Co)
    return (A.reshape(ci * h_in * w_in, co * h_out * w_out),
            np.repeat(b, h_out * w_out))


def prep_params(params):
    """One-time prep: dense MXU-ready conv matrices, fused mu/log_var weight,
    trans composed with the decoder.  Exactly the same affine maps as the
    original layers (bf16 quantization on the big GEMM weights only)."""
    f64 = np.float64
    We = np.asarray(params["W_enc"], f64); be = np.asarray(params["b_enc"], f64)
    Wd = np.asarray(params["W_dec"], f64); bd = np.asarray(params["b_dec"], f64)
    Wmu = np.asarray(params["W_mu"], f64); bmu = np.asarray(params["b_mu"], f64)
    Wlv = np.asarray(params["W_lv"], f64); blv = np.asarray(params["b_lv"], f64)
    Wtr = np.asarray(params["W_tr"], f64); btr = np.asarray(params["b_tr"], f64)

    A_enc, b_enc_full = conv2d_to_dense(We, be, H, W, STRIDE, PAD)       # (1024,512)
    A_dec, b_dec_full = convT2d_to_dense(Wd, bd, H_F, W_F, STRIDE, PAD)  # (512,1024)

    # trans Linear composed with the ConvTranspose (exact affine composition)
    M_zdec = Wtr.T @ A_dec                     # (Z_DIM, C_IN*H*W)
    b_zdec = btr @ A_dec + b_dec_full          # (C_IN*H*W,)

    W_ml = np.concatenate([Wmu.T, Wlv.T], axis=1)   # (N_FEATURES, 2*Z_DIM)
    b_ml = np.concatenate([bmu, blv])               # (2*Z_DIM,)

    return {
        # big GEMM weights in bf16 (f32 accumulation in-kernel), biases f32
        "A_enc": jnp.asarray(A_enc.astype(np.float32), jnp.bfloat16),
        "b_enc": jnp.asarray(b_enc_full.astype(np.float32)).reshape(1, -1),
        "W_ml": jnp.asarray(W_ml.astype(np.float32), jnp.bfloat16),
        "b_ml": jnp.asarray(b_ml.astype(np.float32)).reshape(1, -1),
        "M_zdec": jnp.asarray(M_zdec.astype(np.float32), jnp.bfloat16),
        "b_zdec": jnp.asarray(b_zdec.astype(np.float32)).reshape(1, -1),
    }


# --------------------------- parameter init --------------------------------

def init_params(key):
    ks = jax.random.split(key, 8)
    s = 0.05
    return {
        "W_enc": s * jax.random.normal(ks[0], (C_FEAT, C_IN, K, K), jnp.float32),
        "b_enc": s * jax.random.normal(ks[1], (C_FEAT,), jnp.float32),
        "W_dec": s * jax.random.normal(ks[2], (C_FEAT, C_IN, K, K), jnp.float32),
        "b_dec": s * jax.random.normal(ks[3], (C_IN,), jnp.float32),
        "W_mu":  s * jax.random.normal(ks[4], (Z_DIM, N_FEATURES), jnp.float32),
        "b_mu":  jnp.zeros((Z_DIM,), jnp.float32),
        "W_lv":  s * jax.random.normal(ks[5], (Z_DIM, N_FEATURES), jnp.float32),
        "b_lv":  jnp.zeros((Z_DIM,), jnp.float32),
        "W_tr":  s * jax.random.normal(ks[6], (N_FEATURES, Z_DIM), jnp.float32),
        "b_tr":  s * jax.random.normal(ks[7], (N_FEATURES,), jnp.float32),
    }


# ------------------- float64 NumPy reference (PyTorch semantics) ------------

def vae_reference(x, params, eps):
    f64 = np.float64
    xn = np.asarray(x, f64)
    We = np.asarray(params["W_enc"], f64); be = np.asarray(params["b_enc"], f64)
    Wd = np.asarray(params["W_dec"], f64); bd = np.asarray(params["b_dec"], f64)
    Wmu = np.asarray(params["W_mu"], f64); bmu = np.asarray(params["b_mu"], f64)
    Wlv = np.asarray(params["W_lv"], f64); blv = np.asarray(params["b_lv"], f64)
    Wtr = np.asarray(params["W_tr"], f64); btr = np.asarray(params["b_tr"], f64)
    ep = np.asarray(eps, f64)
    bb = xn.shape[0]

    # encoder: Conv2d(k=4, s=2, p=1) + ReLU
    xp = np.pad(xn, ((0, 0), (0, 0), (PAD, PAD), (PAD, PAD)))
    h = np.zeros((bb, C_FEAT, H_F, W_F), f64)
    for oh in range(H_F):
        for ow in range(W_F):
            patch = xp[:, :, STRIDE * oh:STRIDE * oh + K, STRIDE * ow:STRIDE * ow + K]
            h[:, :, oh, ow] = np.einsum("bcij,ocij->bo", patch, We) + be
    h = np.maximum(h, 0.0).reshape(bb, -1)

    mu = h @ Wmu.T + bmu
    lv = h @ Wlv.T + blv
    z = mu + np.exp(0.5 * lv) * ep
    t = (z @ Wtr.T + btr).reshape(bb, C_FEAT, H_F, W_F)

    # decoder: ConvTranspose2d(k=4, s=2, p=1), then tanh
    xr = np.zeros((bb, C_IN, H, W), f64)
    for ih in range(H_F):
        for iw in range(W_F):
            contrib = np.einsum("bi,ioxy->boxy", t[:, :, ih, iw], Wd)
            for ki in range(K):
                oh = STRIDE * ih + ki - PAD
                if oh < 0 or oh >= H:
                    continue
                for kj in range(K):
                    ow = STRIDE * iw + kj - PAD
                    if ow < 0 or ow >= W:
                        continue
                    xr[:, :, oh, ow] += contrib[:, :, ki, kj]
    xr += bd[None, :, None, None]
    return np.tanh(xr), mu, lv


def _check(x, params, eps, x_rec, mu, log_sigma2):
    xr_np, mu_np, lv_np = vae_reference(x, params, eps)
    assert x_rec.shape == (x.shape[0], C_IN, H, W)
    assert mu.shape == (x.shape[0], Z_DIM)
    assert log_sigma2.shape == (x.shape[0], Z_DIM)
    assert bool(jnp.all(jnp.isfinite(x_rec)))
    assert float(np.max(np.abs(np.asarray(x_rec, np.float64) - xr_np))) < 3e-2
    assert float(np.max(np.abs(np.asarray(mu, np.float64) - mu_np))) < 5e-2
    assert float(np.max(np.abs(np.asarray(log_sigma2, np.float64) - lv_np))) < 5e-2


# ---------------------------------- main ------------------------------------

if __name__ == "__main__":
    key = jax.random.PRNGKey(0)
    k_x, k_p, k_eps, k_x2, k_eps2 = jax.random.split(key, 5)

    params = init_params(k_p)
    prep = prep_params(params)        # one-time, hoisted weight preprocessing

    # --- small-batch forward (B=2): single grid step --------------------
    x = jax.random.normal(k_x, (B, C_IN, H, W), jnp.float32)
    eps = jax.random.normal(k_eps, (B, Z_DIM), jnp.float32)   # torch.randn_like(mu)

    fwd = jax.jit(vae_forward)
    x_rec, mu, log_sigma2 = fwd(x, prep, eps)
    jax.block_until_ready((x_rec, mu, log_sigma2))
    _check(x, params, eps, x_rec, mu, log_sigma2)

    # --- multi-step grid path: exercises batch padding + weight residency ---
    B2 = 20
    x2 = jax.random.normal(k_x2, (B2, C_IN, H, W), jnp.float32)
    eps2 = jax.random.normal(k_eps2, (B2, Z_DIM), jnp.float32)
    fwd2 = jax.jit(functools.partial(vae_forward, block_batch=8))  # grid=(3,)
    x_rec2, mu2, log_sigma22 = fwd2(x2, prep, eps2)
    jax.block_until_ready((x_rec2, mu2, log_sigma22))
    _check(x2, params, eps2, x_rec2, mu2, log_sigma22)

    print("KERNEL_OK")
</pallas_src>

<mosaic_0001>
module attributes {stable_mosaic.version = 11 : i64} {
  func.func @_vae_fused_kernel(%arg0: i32, %arg1: memref<8x1024xbf16, #tpu.memory_space<vmem>>, %arg2: memref<8x16xf32, #tpu.memory_space<vmem>>, %arg3: memref<1024x512xbf16, #tpu.memory_space<vmem>>, %arg4: memref<1x512xf32, #tpu.memory_space<vmem>>, %arg5: memref<512x32xbf16, #tpu.memory_space<vmem>>, %arg6: memref<1x32xf32, #tpu.memory_space<vmem>>, %arg7: memref<16x1024xbf16, #tpu.memory_space<vmem>>, %arg8: memref<1x1024xf32, #tpu.memory_space<vmem>>, %arg9: memref<8x1024xf32, #tpu.memory_space<vmem>>, %arg10: memref<8x32xf32, #tpu.memory_space<vmem>>) attributes {dimension_semantics = [#tpu.dimension_semantics<parallel>], iteration_bounds = array<i64: 1>, scalar_prefetch = 0 : i64, scratch_operands = 0 : i64, tpu.core_type = #tpu.core_type<tc>, window_params = [{transform_indices = @transform_0, window_bounds = array<i64: 8, 1024>}, {transform_indices = @transform_1, window_bounds = array<i64: 8, 16>}, {pipeline_mode = #tpu.pipeline_mode<synchronous>, transform_indices = @transform_2, window_bounds = array<i64: 1024, 512>}, {pipeline_mode = #tpu.pipeline_mode<synchronous>, transform_indices = @transform_3, window_bounds = array<i64: 1, 512>}, {pipeline_mode = #tpu.pipeline_mode<synchronous>, transform_indices = @transform_4, window_bounds = array<i64: 512, 32>}, {pipeline_mode = #tpu.pipeline_mode<synchronous>, transform_indices = @transform_5, window_bounds = array<i64: 1, 32>}, {pipeline_mode = #tpu.pipeline_mode<synchronous>, transform_indices = @transform_6, window_bounds = array<i64: 16, 1024>}, {pipeline_mode = #tpu.pipeline_mode<synchronous>, transform_indices = @transform_7, window_bounds = array<i64: 1, 1024>}, {transform_indices = @transform_8, window_bounds = array<i64: 8, 1024>}, {transform_indices = @transform_9, window_bounds = array<i64: 8, 32>}]} {
    %c0 = arith.constant 0 : index
    %c0_0 = arith.constant 0 : index
    %0 = vector.load %arg1[%c0, %c0_0] : memref<8x1024xbf16, #tpu.memory_space<vmem>>, vector<8x1024xbf16>
    %c0_1 = arith.constant 0 : index
    %c0_2 = arith.constant 0 : index
    %1 = vector.load %arg3[%c0_1, %c0_2] : memref<1024x512xbf16, #tpu.memory_space<vmem>>, vector<1024x512xbf16>
    %cst = arith.constant dense<0.000000e+00> : vector<8x512xf32>
    %2 = tpu.matmul %0, %1, %cst {dimension_numbers = #tpu.dot_dimension_numbers<[1], [0], [0], [1], [0, 0, 1, 1], [], []>} : vector<8x1024xbf16>, vector<1024x512xbf16>, vector<8x512xf32> -> vector<8x512xf32>
    %c0_3 = arith.constant 0 : index
    %c0_4 = arith.constant 0 : index
    %3 = vector.load %arg4[%c0_3, %c0_4] : memref<1x512xf32, #tpu.memory_space<vmem>>, vector<1x512xf32>
    %4 = vector.broadcast %3 : vector<1x512xf32> to vector<8x512xf32>
    %5 = arith.addf %2, %4 : vector<8x512xf32>
    %cst_5 = arith.constant 0.000000e+00 : f32
    %6 = vector.broadcast %cst_5 : f32 to vector<8x512xf32>
    %7 = arith.maximumf %5, %6 : vector<8x512xf32>
    %8 = arith.truncf %7 : vector<8x512xf32> to vector<8x512xbf16>
    %c0_6 = arith.constant 0 : index
    %c0_7 = arith.constant 0 : index
    %9 = vector.load %arg5[%c0_6, %c0_7] : memref<512x32xbf16, #tpu.memory_space<vmem>>, vector<512x32xbf16>
    %cst_8 = arith.constant dense<0.000000e+00> : vector<8x32xf32>
    %10 = tpu.matmul %8, %9, %cst_8 {dimension_numbers = #tpu.dot_dimension_numbers<[1], [0], [0], [1], [0, 0, 1, 1], [], []>} : vector<8x512xbf16>, vector<512x32xbf16>, vector<8x32xf32> -> vector<8x32xf32>
    %c0_9 = arith.constant 0 : index
    %c0_10 = arith.constant 0 : index
    %11 = vector.load %arg6[%c0_9, %c0_10] : memref<1x32xf32, #tpu.memory_space<vmem>>, vector<1x32xf32>
    %12 = vector.broadcast %11 : vector<1x32xf32> to vector<8x32xf32>
    %13 = arith.addf %10, %12 : vector<8x32xf32>
    %14 = vector.extract_strided_slice %13 {offsets = [0, 0], sizes = [8, 16], strides = [1, 1]} : vector<8x32xf32> to vector<8x16xf32>
    %15 = vector.extract_strided_slice %13 {offsets = [0, 16], sizes = [8, 16], strides = [1, 1]} : vector<8x32xf32> to vector<8x16xf32>
    %cst_11 = arith.constant 5.000000e-01 : f32
    %16 = vector.broadcast %cst_11 : f32 to vector<8x16xf32>
    %17 = arith.mulf %16, %15 : vector<8x16xf32>
    %18 = math.exp %17 : vector<8x16xf32>
    %c0_12 = arith.constant 0 : index
    %c0_13 = arith.constant 0 : index
    %19 = vector.load %arg2[%c0_12, %c0_13] : memref<8x16xf32, #tpu.memory_space<vmem>>, vector<8x16xf32>
    %20 = arith.mulf %18, %19 : vector<8x16xf32>
    %21 = arith.addf %14, %20 : vector<8x16xf32>
    %22 = arith.truncf %21 : vector<8x16xf32> to vector<8x16xbf16>
    %c0_14 = arith.constant 0 : index
    %c0_15 = arith.constant 0 : index
    %23 = vector.load %arg7[%c0_14, %c0_15] : memref<16x1024xbf16, #tpu.memory_space<vmem>>, vector<16x1024xbf16>
    %cst_16 = arith.constant dense<0.000000e+00> : vector<8x1024xf32>
    %24 = tpu.matmul %22, %23, %cst_16 {dimension_numbers = #tpu.dot_dimension_numbers<[1], [0], [0], [1], [0, 0, 1, 1], [], []>} : vector<8x16xbf16>, vector<16x1024xbf16>, vector<8x1024xf32> -> vector<8x1024xf32>
    %c0_17 = arith.constant 0 : index
    %c0_18 = arith.constant 0 : index
    %25 = vector.load %arg8[%c0_17, %c0_18] : memref<1x1024xf32, #tpu.memory_space<vmem>>, vector<1x1024xf32>
    %26 = vector.broadcast %25 : vector<1x1024xf32> to vector<8x1024xf32>
    %27 = arith.addf %24, %26 : vector<8x1024xf32>
    %28 = math.tanh %27 : vector<8x1024xf32>
    %c0_19 = arith.constant 0 : index
    %c0_20 = arith.constant 0 : index
    %29 = vector.load %arg9[%c0_19, %c0_20] : memref<8x1024xf32, #tpu.memory_space<vmem>>, vector<8x1024xf32>
    tpu.vector_store %arg9[%c0_19, %c0_20], %28 {strides = array<i32>} : memref<8x1024xf32, #tpu.memory_space<vmem>>, vector<8x1024xf32>,
    %c0_21 = arith.constant 0 : index
    %c0_22 = arith.constant 0 : index
    %30 = vector.load %arg10[%c0_21, %c0_22] : memref<8x32xf32, #tpu.memory_space<vmem>>, vector<8x32xf32>
    tpu.vector_store %arg10[%c0_21, %c0_22], %13 {strides = array<i32>} : memref<8x32xf32, #tpu.memory_space<vmem>>, vector<8x32xf32>,
    return
  }
  func.func @transform_0(%arg0: i32) -> (i32, i32) {
    %c0_i32 = arith.constant 0 : i32
    %c0_i32_0 = arith.constant 0 : i32
    return %arg0, %c0_i32 : i32, i32
  }
  func.func @transform_1(%arg0: i32) -> (i32, i32) {
    %c0_i32 = arith.constant 0 : i32
    %c0_i32_0 = arith.constant 0 : i32
    return %arg0, %c0_i32 : i32, i32
  }
  func.func @transform_2(%arg0: i32) -> (i32, i32) {
    %c0_i32 = arith.constant 0 : i32
    %c0_i32_0 = arith.constant 0 : i32
    %c0_i32_1 = arith.constant 0 : i32
    return %c0_i32, %c0_i32_0 : i32, i32
  }
  func.func @transform_3(%arg0: i32) -> (i32, i32) {
    %c0_i32 = arith.constant 0 : i32
    %c0_i32_0 = arith.constant 0 : i32
    %c0_i32_1 = arith.constant 0 : i32
    return %c0_i32, %c0_i32_0 : i32, i32
  }
  func.func @transform_4(%arg0: i32) -> (i32, i32) {
    %c0_i32 = arith.constant 0 : i32
    %c0_i32_0 = arith.constant 0 : i32
    %c0_i32_1 = arith.constant 0 : i32
    return %c0_i32, %c0_i32_0 : i32, i32
  }
  func.func @transform_5(%arg0: i32) -> (i32, i32) {
    %c0_i32 = arith.constant 0 : i32
    %c0_i32_0 = arith.constant 0 : i32
    %c0_i32_1 = arith.constant 0 : i32
    return %c0_i32, %c0_i32_0 : i32, i32
  }
  func.func @transform_6(%arg0: i32) -> (i32, i32) {
    %c0_i32 = arith.constant 0 : i32
    %c0_i32_0 = arith.constant 0 : i32
    %c0_i32_1 = arith.constant 0 : i32
    return %c0_i32, %c0_i32_0 : i32, i32
  }
  func.func @transform_7(%arg0: i32) -> (i32, i32) {
    %c0_i32 = arith.constant 0 : i32
    %c0_i32_0 = arith.constant 0 : i32
    %c0_i32_1 = arith.constant 0 : i32
    return %c0_i32, %c0_i32_0 : i32, i32
  }
  func.func @transform_8(%arg0: i32) -> (i32, i32) {
    %c0_i32 = arith.constant 0 : i32
    %c0_i32_0 = arith.constant 0 : i32
    return %arg0, %c0_i32 : i32, i32
  }
  func.func @transform_9(%arg0: i32) -> (i32, i32) {
    %c0_i32 = arith.constant 0 : i32
    %c0_i32_0 = arith.constant 0 : i32
    return %arg0, %c0_i32 : i32, i32
  }
}

</mosaic_0001>

<llo_original>
// kernel: vae_forward.1
$region0: #{vae_forward.1}
  #allocation0 [shape = 'u32[]', space=smem, size = 0x4, offset = 0x4, fixed_abs, tag = 'smem constant byte address 0x4 - core index']
  #allocation1 [shape = 'u32[72,128]{1,0:T(1,128)}', space=vmem, size = 0x9000, scoped, tag = 'internal scratch']
  %s0 = inlined_call_operand.vmem [shape: bf16[8,1024], index: 0, kind: input, shape index: {}]
  %s1 = inlined_call_operand.vmem [shape: f32[8,16], index: 1, kind: input, shape index: {}]
  %s2 = inlined_call_operand.hbm [shape: bf16[1024,512], index: 2, kind: input, shape index: {}]
  %s3 = inlined_call_operand.vmem [shape: f32[1,512], index: 3, kind: input, shape index: {}]
  %s4 = inlined_call_operand.vmem [shape: bf16[512,32], index: 4, kind: input, shape index: {}]
  %s5 = inlined_call_operand.vmem [shape: f32[1,32], index: 5, kind: input, shape index: {}]
  %s6 = inlined_call_operand.vmem [shape: bf16[16,1024], index: 6, kind: input, shape index: {}]
  %s7 = inlined_call_operand.vmem [shape: f32[1,1024], index: 7, kind: input, shape index: {}]
  %s8 = inlined_call_operand.vmem [shape: f32[8,1024], index: 8, kind: output, shape index: {0}]
  %s9 = inlined_call_operand.vmem [shape: f32[8,32], index: 9, kind: output, shape index: {1}]
  %10 = xla_tuple %s8, %s9
  %s11 = sld [smem:[#allocation0]]
  $region54: #{vae_forward.1} parent=0
    _
  %s13 = ssub.s32 1, %s11
  %s14 = scalar_select 0, %s13, %s11
  $region1: #{vae_forward.1} parent=0
    #allocation2 [shape = 'u8[1048576]{0}', space=vmem, size = 0x100000, scoped, tag = 'input window, operand 2, single buffered']
    #allocation3 [shape = 's32[1]{0}', space=sflag, size = 0x4, scoped, tag = 'scoped memory for vae_forward.1']
    %15 = vsyncpa [#allocation3], 0
    // Predicated region
    $region2: #{vae_forward.1} parent=1 // pred_check
      _
    $region3: #{vae_forward.1} parent=1 // pred_check_branch
      %17 = sbr.rel (0) target = $region5
    $region4: #{vae_forward.1} parent=1 // pred_region
      _
    $region5: #{vae_forward.1} parent=1 // pred_fallthru
      _
    // Predicated region
    $region6: #{vae_forward.1} parent=1 // pred_check
      _
    $region7: #{vae_forward.1} parent=1 // pred_check_branch
      %19 = sbr.rel (0) target = $region9
    $region8: #{vae_forward.1} parent=1 // pred_region
      _
    $region9: #{vae_forward.1} parent=1 // pred_fallthru
      _
    // Predicated region
    $region10: #{vae_forward.1} parent=1 // pred_check
      _
    $region11: #{vae_forward.1} parent=1 // pred_check_branch
      %21 = sbr.rel (0) target = $region13
    $region12: #{vae_forward.1} parent=1 // pred_region
      %23 = vsyncadd [#allocation3], 0
      %s24 = sshll.u32 %s2, 4
      %s25 = int_to_ptr.hbm [resolvable:$true] %s24
      %s26 = sshll.u32 [#allocation2], 4
      %s27 = int_to_ptr.vmem [resolvable:$true] %s26
      %32 = dma.hbm_to_vmem [thread:$0]  %s25, 32768, %s27, [#allocation3], 256, 256, 16
    $region13: #{vae_forward.1} parent=1 // pred_fallthru
      _
    // Predicated region
    $region14: #{vae_forward.1} parent=1 // pred_check
      _
    $region15: #{vae_forward.1} parent=1 // pred_check_branch
      %34 = sbr.rel (0) target = $region17
    $region16: #{vae_forward.1} parent=1 // pred_region
      _
    $region17: #{vae_forward.1} parent=1 // pred_fallthru
      _
    // Predicated region
    $region18: #{vae_forward.1} parent=1 // pred_check
      _
    $region19: #{vae_forward.1} parent=1 // pred_check_branch
      %36 = sbr.rel (0) target = $region21
    $region20: #{vae_forward.1} parent=1 // pred_region
      _
    $region21: #{vae_forward.1} parent=1 // pred_fallthru
      _
    // Predicated region
    $region22: #{vae_forward.1} parent=1 // pred_check
      _
    $region23: #{vae_forward.1} parent=1 // pred_check_branch
      %38 = sbr.rel (0) target = $region25
    $region24: #{vae_forward.1} parent=1 // pred_region
      _
    $region25: #{vae_forward.1} parent=1 // pred_fallthru
      _
    // Predicated region
    $region26: #{vae_forward.1} parent=1 // pred_check
      _
    $region27: #{vae_forward.1} parent=1 // pred_check_branch
      %40 = sbr.rel (0) target = $region29
    $region28: #{vae_forward.1} parent=1 // pred_region
      _
    $region29: #{vae_forward.1} parent=1 // pred_fallthru
      _
    // Predicated region
    $region30: #{vae_forward.1} parent=1 // pred_check
      _
    $region31: #{vae_forward.1} parent=1 // pred_check_branch
      %42 = sbr.rel (0) target = $region33
    $region32: #{vae_forward.1} parent=1 // pred_region
      _
    $region33: #{vae_forward.1} parent=1 // pred_fallthru
      _
    // Predicated region
    $region34: #{vae_forward.1} parent=1 // pred_check
      _
    $region35: #{vae_forward.1} parent=1 // pred_check_branch
      %44 = sbr.rel (0) target = $region37
    $region36: #{vae_forward.1} parent=1 // pred_region
      %46 = dma.done [#allocation3], 32768
    $region37: #{vae_forward.1} parent=1 // pred_fallthru
      _
    %v48 = vld [vmem:[%s0] sm:$0xff]
    %v49 = vld [vmem:[%s0 + $0x8] sm:$0xff]
    %v50 = vld [vmem:[%s0 + $0x10] sm:$0xff]
    %v51 = vld [vmem:[%s0 + $0x18] sm:$0xff]
    %v52 = vld [vmem:[#allocation2] sm:$0xff]
    %v53 = vld [vmem:[#allocation2 + $0x8] sm:$0xff]
    %v54 = vld [vmem:[#allocation2 + $0x10] sm:$0xff]
    %v55 = vld [vmem:[#allocation2 + $0x18] sm:$0xff]
    %v56 = vld [vmem:[#allocation2 + $0x20] sm:$0xff]
    %v57 = vld [vmem:[#allocation2 + $0x28] sm:$0xff]
    %v58 = vld [vmem:[#allocation2 + $0x30] sm:$0xff]
    %v59 = vld [vmem:[#allocation2 + $0x38] sm:$0xff]
    %v60 = vld [vmem:[#allocation2 + $0x40] sm:$0xff]
    %v61 = vld [vmem:[#allocation2 + $0x48] sm:$0xff]
    %v62 = vld [vmem:[#allocation2 + $0x50] sm:$0xff]
    %v63 = vld [vmem:[#allocation2 + $0x58] sm:$0xff]
    %v64 = vld [vmem:[#allocation2 + $0x60] sm:$0xff]
    %v65 = vld [vmem:[#allocation2 + $0x68] sm:$0xff]
    %v66 = vld [vmem:[#allocation2 + $0x70] sm:$0xff]
    %v67 = vld [vmem:[#allocation2 + $0x78] sm:$0xff]
    %v68 = vld [vmem:[#allocation2 + $0x80] sm:$0xff]
    %v69 = vld [vmem:[#allocation2 + $0x88] sm:$0xff]
    %v70 = vld [vmem:[#allocation2 + $0x90] sm:$0xff]
    %v71 = vld [vmem:[#allocation2 + $0x98] sm:$0xff]
    %v72 = vld [vmem:[#allocation2 + $0xa0] sm:$0xff]
    %v73 = vld [vmem:[#allocation2 + $0xa8] sm:$0xff]
    %v74 = vld [vmem:[#allocation2 + $0xb0] sm:$0xff]
    %v75 = vld [vmem:[#allocation2 + $0xb8] sm:$0xff]
    %v76 = vld [vmem:[#allocation2 + $0xc0] sm:$0xff]
    %v77 = vld [vmem:[#allocation2 + $0xc8] sm:$0xff]
    %v78 = vld [vmem:[#allocation2 + $0xd0] sm:$0xff]
    %v79 = vld [vmem:[#allocation2 + $0xd8] sm:$0xff]
    %v80 = vld [vmem:[#allocation2 + $0xe0] sm:$0xff]
    %v81 = vld [vmem:[#allocation2 + $0xe8] sm:$0xff]
    %v82 = vld [vmem:[#allocation2 + $0xf0] sm:$0xff]
    %v83 = vld [vmem:[#allocation2 + $0xf8] sm:$0xff]
    %v84 = vld [vmem:[#allocation2 + $0x100] sm:$0xff]
    %v85 = vld [vmem:[#allocation2 + $0x108] sm:$0xff]
    %v86 = vld [vmem:[#allocation2 + $0x110] sm:$0xff]
    %v87 = vld [vmem:[#allocation2 + $0x118] sm:$0xff]
    %v88 = vld [vmem:[#allocation2 + $0x120] sm:$0xff]
    %v89 = vld [vmem:[#allocation2 + $0x128] sm:$0xff]
    %v90 = vld [vmem:[#allocation2 + $0x130] sm:$0xff]
    %v91 = vld [vmem:[#allocation2 + $0x138] sm:$0xff]
    %v92 = vld [vmem:[#allocation2 + $0x140] sm:$0xff]
    %v93 = vld [vmem:[#allocation2 + $0x148] sm:$0xff]
    %v94 = vld [vmem:[#allocation2 + $0x150] sm:$0xff]
    %v95 = vld [vmem:[#allocation2 + $0x158] sm:$0xff]
    %v96 = vld [vmem:[#allocation2 + $0x160] sm:$0xff]
    %v97 = vld [vmem:[#allocation2 + $0x168] sm:$0xff]
    %v98 = vld [vmem:[#allocation2 + $0x170] sm:$0xff]
    %v99 = vld [vmem:[#allocation2 + $0x178] sm:$0xff]
    %v100 = vld [vmem:[#allocation2 + $0x180] sm:$0xff]
    %v101 = vld [vmem:[#allocation2 + $0x188] sm:$0xff]
    %v102 = vld [vmem:[#allocation2 + $0x190] sm:$0xff]
    %v103 = vld [vmem:[#allocation2 + $0x198] sm:$0xff]
    %v104 = vld [vmem:[#allocation2 + $0x1a0] sm:$0xff]
    %v105 = vld [vmem:[#allocation2 + $0x1a8] sm:$0xff]
    %v106 = vld [vmem:[#allocation2 + $0x1b0] sm:$0xff]
    %v107 = vld [vmem:[#allocation2 + $0x1b8] sm:$0xff]
    %v108 = vld [vmem:[#allocation2 + $0x1c0] sm:$0xff]
    %v109 = vld [vmem:[#allocation2 + $0x1c8] sm:$0xff]
    %v110 = vld [vmem:[#allocation2 + $0x1d0] sm:$0xff]
    %v111 = vld [vmem:[#allocation2 + $0x1d8] sm:$0xff]
    %v112 = vld [vmem:[#allocation2 + $0x1e0] sm:$0xff]
    %v113 = vld [vmem:[#allocation2 + $0x1e8] sm:$0xff]
    %v114 = vld [vmem:[#allocation2 + $0x1f0] sm:$0xff]
    %v115 = vld [vmem:[#allocation2 + $0x1f8] sm:$0xff]
    %v116 = vld [vmem:[#allocation2 + $0x200] sm:$0xff]
    %v117 = vld [vmem:[#allocation2 + $0x208] sm:$0xff]
    %v118 = vld [vmem:[#allocation2 + $0x210] sm:$0xff]
    %v119 = vld [vmem:[#allocation2 + $0x218] sm:$0xff]
    %v120 = vld [vmem:[#allocation2 + $0x220] sm:$0xff]
    %v121 = vld [vmem:[#allocation2 + $0x228] sm:$0xff]
    %v122 = vld [vmem:[#allocation2 + $0x230] sm:$0xff]
    %v123 = vld [vmem:[#allocation2 + $0x238] sm:$0xff]
    %v124 = vld [vmem:[#allocation2 + $0x240] sm:$0xff]
    %v125 = vld [vmem:[#allocation2 + $0x248] sm:$0xff]
    %v126 = vld [vmem:[#allocation2 + $0x250] sm:$0xff]
    %v127 = vld [vmem:[#allocation2 + $0x258] sm:$0xff]
    %v128 = vld [vmem:[#allocation2 + $0x260] sm:$0xff]
    %v129 = vld [vmem:[#allocation2 + $0x268] sm:$0xff]
    %v130 = vld [vmem:[#allocation2 + $0x270] sm:$0xff]
    %v131 = vld [vmem:[#allocation2 + $0x278] sm:$0xff]
    %v132 = vld [vmem:[#allocation2 + $0x280] sm:$0xff]
    %v133 = vld [vmem:[#allocation2 + $0x288] sm:$0xff]
    %v134 = vld [vmem:[#allocation2 + $0x290] sm:$0xff]
    %v135 = vld [vmem:[#allocation2 + $0x298] sm:$0xff]
    %v136 = vld [vmem:[#allocation2 + $0x2a0] sm:$0xff]
    %v137 = vld [vmem:[#allocation2 + $0x2a8] sm:$0xff]
    %v138 = vld [vmem:[#allocation2 + $0x2b0] sm:$0xff]
    %v139 = vld [vmem:[#allocation2 + $0x2b8] sm:$0xff]
    %v140 = vld [vmem:[#allocation2 + $0x2c0] sm:$0xff]
    %v141 = vld [vmem:[#allocation2 + $0x2c8] sm:$0xff]
    %v142 = vld [vmem:[#allocation2 + $0x2d0] sm:$0xff]
    %v143 = vld [vmem:[#allocation2 + $0x2d8] sm:$0xff]
    %v144 = vld [vmem:[#allocation2 + $0x2e0] sm:$0xff]
    %v145 = vld [vmem:[#allocation2 + $0x2e8] sm:$0xff]
    %v146 = vld [vmem:[#allocation2 + $0x2f0] sm:$0xff]
    %v147 = vld [vmem:[#allocation2 + $0x2f8] sm:$0xff]
    %v148 = vld [vmem:[#allocation2 + $0x300] sm:$0xff]
    %v149 = vld [vmem:[#allocation2 + $0x308] sm:$0xff]
    %v150 = vld [vmem:[#allocation2 + $0x310] sm:$0xff]
    %v151 = vld [vmem:[#allocation2 + $0x318] sm:$0xff]
    %v152 = vld [vmem:[#allocation2 + $0x320] sm:$0xff]
    %v153 = vld [vmem:[#allocation2 + $0x328] sm:$0xff]
    %v154 = vld [vmem:[#allocation2 + $0x330] sm:$0xff]
    %v155 = vld [vmem:[#allocation2 + $0x338] sm:$0xff]
    %v156 = vld [vmem:[#allocation2 + $0x340] sm:$0xff]
    %v157 = vld [vmem:[#allocation2 + $0x348] sm:$0xff]
    %v158 = vld [vmem:[#allocation2 + $0x350] sm:$0xff]
    %v159 = vld [vmem:[#allocation2 + $0x358] sm:$0xff]
    %v160 = vld [vmem:[#allocation2 + $0x360] sm:$0xff]
    %v161 = vld [vmem:[#allocation2 + $0x368] sm:$0xff]
    %v162 = vld [vmem:[#allocation2 + $0x370] sm:$0xff]
    %v163 = vld [vmem:[#allocation2 + $0x378] sm:$0xff]
    %v164 = vld [vmem:[#allocation2 + $0x380] sm:$0xff]
    %v165 = vld [vmem:[#allocation2 + $0x388] sm:$0xff]
    %v166 = vld [vmem:[#allocation2 + $0x390] sm:$0xff]
    %v167 = vld [vmem:[#allocation2 + $0x398] sm:$0xff]
    %v168 = vld [vmem:[#allocation2 + $0x3a0] sm:$0xff]
    %v169 = vld [vmem:[#allocation2 + $0x3a8] sm:$0xff]
    %v170 = vld [vmem:[#allocation2 + $0x3b0] sm:$0xff]
    %v171 = vld [vmem:[#allocation2 + $0x3b8] sm:$0xff]
    %v172 = vld [vmem:[#allocation2 + $0x3c0] sm:$0xff]
    %v173 = vld [vmem:[#allocation2 + $0x3c8] sm:$0xff]
    %v174 = vld [vmem:[#allocation2 + $0x3d0] sm:$0xff]
    %v175 = vld [vmem:[#allocation2 + $0x3d8] sm:$0xff]
    %v176 = vld [vmem:[#allocation2 + $0x3e0] sm:$0xff]
    %v177 = vld [vmem:[#allocation2 + $0x3e8] sm:$0xff]
    %v178 = vld [vmem:[#allocation2 + $0x3f0] sm:$0xff]
    %v179 = vld [vmem:[#allocation2 + $0x3f8] sm:$0xff]
    %v180 = vld [vmem:[#allocation2 + $0x400] sm:$0xff]
    %v181 = vld [vmem:[#allocation2 + $0x408] sm:$0xff]
    %v182 = vld [vmem:[#allocation2 + $0x410] sm:$0xff]
    %v183 = vld [vmem:[#allocation2 + $0x418] sm:$0xff]
    %v184 = vld [vmem:[#allocation2 + $0x420] sm:$0xff]
    %v185 = vld [vmem:[#allocation2 + $0x428] sm:$0xff]
    %v186 = vld [vmem:[#allocation2 + $0x430] sm:$0xff]
    %v187 = vld [vmem:[#allocation2 + $0x438] sm:$0xff]
    %v188 = vld [vmem:[#allocation2 + $0x440] sm:$0xff]
    %v189 = vld [vmem:[#allocation2 + $0x448] sm:$0xff]
    %v190 = vld [vmem:[#allocation2 + $0x450] sm:$0xff]
    %v191 = vld [vmem:[#allocation2 + $0x458] sm:$0xff]
    %v192 = vld [vmem:[#allocation2 + $0x460] sm:$0xff]
    %v193 = vld [vmem:[#allocation2 + $0x468] sm:$0xff]
    %v194 = vld [vmem:[#allocation2 + $0x470] sm:$0xff]
    %v195 = vld [vmem:[#allocation2 + $0x478] sm:$0xff]
    %v196 = vld [vmem:[#allocation2 + $0x480] sm:$0xff]
    %v197 = vld [vmem:[#allocation2 + $0x488] sm:$0xff]
    %v198 = vld [vmem:[#allocation2 + $0x490] sm:$0xff]
    %v199 = vld [vmem:[#allocation2 + $0x498] sm:$0xff]
    %v200 = vld [vmem:[#allocation2 + $0x4a0] sm:$0xff]
    %v201 = vld [vmem:[#allocation2 + $0x4a8] sm:$0xff]
    %v202 = vld [vmem:[#allocation2 + $0x4b0] sm:$0xff]
    %v203 = vld [vmem:[#allocation2 + $0x4b8] sm:$0xff]
    %v204 = vld [vmem:[#allocation2 + $0x4c0] sm:$0xff]
    %v205 = vld [vmem:[#allocation2 + $0x4c8] sm:$0xff]
    %v206 = vld [vmem:[#allocation2 + $0x4d0] sm:$0xff]
    %v207 = vld [vmem:[#allocation2 + $0x4d8] sm:$0xff]
    %v208 = vld [vmem:[#allocation2 + $0x4e0] sm:$0xff]
    %v209 = vld [vmem:[#allocation2 + $0x4e8] sm:$0xff]
    %v210 = vld [vmem:[#allocation2 + $0x4f0] sm:$0xff]
    %v211 = vld [vmem:[#allocation2 + $0x4f8] sm:$0xff]
    %v212 = vld [vmem:[#allocation2 + $0x500] sm:$0xff]
    %v213 = vld [vmem:[#allocation2 + $0x508] sm:$0xff]
    %v214 = vld [vmem:[#allocation2 + $0x510] sm:$0xff]
    %v215 = vld [vmem:[#allocation2 + $0x518] sm:$0xff]
    %v216 = vld [vmem:[#allocation2 + $0x520] sm:$0xff]
    %v217 = vld [vmem:[#allocation2 + $0x528] sm:$0xff]
    %v218 = vld [vmem:[#allocation2 + $0x530] sm:$0xff]
    %v219 = vld [vmem:[#allocation2 + $0x538] sm:$0xff]
    %v220 = vld [vmem:[#allocation2 + $0x540] sm:$0xff]
    %v221 = vld [vmem:[#allocation2 + $0x548] sm:$0xff]
    %v222 = vld [vmem:[#allocation2 + $0x550] sm:$0xff]
    %v223 = vld [vmem:[#allocation2 + $0x558] sm:$0xff]
    %v224 = vld [vmem:[#allocation2 + $0x560] sm:$0xff]
    %v225 = vld [vmem:[#allocation2 + $0x568] sm:$0xff]
    %v226 = vld [vmem:[#allocation2 + $0x570] sm:$0xff]
    %v227 = vld [vmem:[#allocation2 + $0x578] sm:$0xff]
    %v228 = vld [vmem:[#allocation2 + $0x580] sm:$0xff]
    %v229 = vld [vmem:[#allocation2 + $0x588] sm:$0xff]
    %v230 = vld [vmem:[#allocation2 + $0x590] sm:$0xff]
    %v231 = vld [vmem:[#allocation2 + $0x598] sm:$0xff]
    %v232 = vld [vmem:[#allocation2 + $0x5a0] sm:$0xff]
    %v233 = vld [vmem:[#allocation2 + $0x5a8] sm:$0xff]
    %v234 = vld [vmem:[#allocation2 + $0x5b0] sm:$0xff]
    %v235 = vld [vmem:[#allocation2 + $0x5b8] sm:$0xff]
    %v236 = vld [vmem:[#allocation2 + $0x5c0] sm:$0xff]
    %v237 = vld [vmem:[#allocation2 + $0x5c8] sm:$0xff]
    %v238 = vld [vmem:[#allocation2 + $0x5d0] sm:$0xff]
    %v239 = vld [vmem:[#allocation2 + $0x5d8] sm:$0xff]
    %v240 = vld [vmem:[#allocation2 + $0x5e0] sm:$0xff]
    %v241 = vld [vmem:[#allocation2 + $0x5e8] sm:$0xff]
    %v242 = vld [vmem:[#allocation2 + $0x5f0] sm:$0xff]
    %v243 = vld [vmem:[#allocation2 + $0x5f8] sm:$0xff]
    %v244 = vld [vmem:[#allocation2 + $0x600] sm:$0xff]
    %v245 = vld [vmem:[#allocation2 + $0x608] sm:$0xff]
    %v246 = vld [vmem:[#allocation2 + $0x610] sm:$0xff]
    %v247 = vld [vmem:[#allocation2 + $0x618] sm:$0xff]
    %v248 = vld [vmem:[#allocation2 + $0x620] sm:$0xff]
    %v249 = vld [vmem:[#allocation2 + $0x628] sm:$0xff]
    %v250 = vld [vmem:[#allocation2 + $0x630] sm:$0xff]
    %v251 = vld [vmem:[#allocation2 + $0x638] sm:$0xff]
    %v252 = vld [vmem:[#allocation2 + $0x640] sm:$0xff]
    %v253 = vld [vmem:[#allocation2 + $0x648] sm:$0xff]
    %v254 = vld [vmem:[#allocation2 + $0x650] sm:$0xff]
    %v255 = vld [vmem:[#allocation2 + $0x658] sm:$0xff]
    %v256 = vld [vmem:[#allocation2 + $0x660] sm:$0xff]
    %v257 = vld [vmem:[#allocation2 + $0x668] sm:$0xff]
    %v258 = vld [vmem:[#allocation2 + $0x670] sm:$0xff]
    %v259 = vld [vmem:[#allocation2 + $0x678] sm:$0xff]
    %v260 = vld [vmem:[#allocation2 + $0x680] sm:$0xff]
    %v261 = vld [vmem:[#allocation2 + $0x688] sm:$0xff]
    %v262 = vld [vmem:[#allocation2 + $0x690] sm:$0xff]
    %v263 = vld [vmem:[#allocation2 + $0x698] sm:$0xff]
    %v264 = vld [vmem:[#allocation2 + $0x6a0] sm:$0xff]
    %v265 = vld [vmem:[#allocation2 + $0x6a8] sm:$0xff]
    %v266 = vld [vmem:[#allocation2 + $0x6b0] sm:$0xff]
    %v267 = vld [vmem:[#allocation2 + $0x6b8] sm:$0xff]
    %v268 = vld [vmem:[#allocation2 + $0x6c0] sm:$0xff]
    %v269 = vld [vmem:[#allocation2 + $0x6c8] sm:$0xff]
    %v270 = vld [vmem:[#allocation2 + $0x6d0] sm:$0xff]
    %v271 = vld [vmem:[#allocation2 + $0x6d8] sm:$0xff]
    %v272 = vld [vmem:[#allocation2 + $0x6e0] sm:$0xff]
    %v273 = vld [vmem:[#allocation2 + $0x6e8] sm:$0xff]
    %v274 = vld [vmem:[#allocation2 + $0x6f0] sm:$0xff]
    %v275 = vld [vmem:[#allocation2 + $0x6f8] sm:$0xff]
    %v276 = vld [vmem:[#allocation2 + $0x700] sm:$0xff]
    %v277 = vld [vmem:[#allocation2 + $0x708] sm:$0xff]
    %v278 = vld [vmem:[#allocation2 + $0x710] sm:$0xff]
    %v279 = vld [vmem:[#allocation2 + $0x718] sm:$0xff]
    %v280 = vld [vmem:[#allocation2 + $0x720] sm:$0xff]
    %v281 = vld [vmem:[#allocation2 + $0x728] sm:$0xff]
    %v282 = vld [vmem:[#allocation2 + $0x730] sm:$0xff]
    %v283 = vld [vmem:[#allocation2 + $0x738] sm:$0xff]
    %v284 = vld [vmem:[#allocation2 + $0x740] sm:$0xff]
    %v285 = vld [vmem:[#allocation2 + $0x748] sm:$0xff]
    %v286 = vld [vmem:[#allocation2 + $0x750] sm:$0xff]
    %v287 = vld [vmem:[#allocation2 + $0x758] sm:$0xff]
    %v288 = vld [vmem:[#allocation2 + $0x760] sm:$0xff]
    %v289 = vld [vmem:[#allocation2 + $0x768] sm:$0xff]
    %v290 = vld [vmem:[#allocation2 + $0x770] sm:$0xff]
    %v291 = vld [vmem:[#allocation2 + $0x778] sm:$0xff]
    %v292 = vld [vmem:[#allocation2 + $0x780] sm:$0xff]
    %v293 = vld [vmem:[#allocation2 + $0x788] sm:$0xff]
    %v294 = vld [vmem:[#allocation2 + $0x790] sm:$0xff]
    %v295 = vld [vmem:[#allocation2 + $0x798] sm:$0xff]
    %v296 = vld [vmem:[#allocation2 + $0x7a0] sm:$0xff]
    %v297 = vld [vmem:[#allocation2 + $0x7a8] sm:$0xff]
    %v298 = vld [vmem:[#allocation2 + $0x7b0] sm:$0xff]
    %v299 = vld [vmem:[#allocation2 + $0x7b8] sm:$0xff]
    %v300 = vld [vmem:[#allocation2 + $0x7c0] sm:$0xff]
    %v301 = vld [vmem:[#allocation2 + $0x7c8] sm:$0xff]
    %v302 = vld [vmem:[#allocation2 + $0x7d0] sm:$0xff]
    %v303 = vld [vmem:[#allocation2 + $0x7d8] sm:$0xff]
    %v304 = vld [vmem:[#allocation2 + $0x7e0] sm:$0xff]
    %v305 = vld [vmem:[#allocation2 + $0x7e8] sm:$0xff]
    %v306 = vld [vmem:[#allocation2 + $0x7f0] sm:$0xff]
    %v307 = vld [vmem:[#allocation2 + $0x7f8] sm:$0xff]
    %v308 = vld [vmem:[%s3] sm:$0xf]
    %v310 = vperm.slane %v308, 0
    %v311 = vperm.slane %v308, 1
    %v312 = vperm.slane %v308, 2
    %v313 = vperm.slane %v308, 3
    %v322 = vunpack.c.l.b16 %v48
    %v323 = vunpack.c.h.b16 %v48
    %v324 = vunpack.c.l.b16 %v49
    %v325 = vunpack.c.h.b16 %v49
    %v326 = vunpack.c.l.b16 %v50
    %v327 = vunpack.c.h.b16 %v50
    %v328 = vunpack.c.l.b16 %v51
    %v329 = vunpack.c.h.b16 %v51
    %v330 = vpack.c.b16 %v322, %v322
    %v331 = vpack.c.b16 %v323, %v323
    %v332 = vpack.c.b16 %v324, %v324
    %v333 = vpack.c.b16 %v325, %v325
    %v334 = vpack.c.b16 %v326, %v326
    %v335 = vpack.c.b16 %v327, %v327
    %v336 = vpack.c.b16 %v328, %v328
    %v337 = vpack.c.b16 %v329, %v329
    %v602 = vunpack.c.l.b16 %v52
    %v603 = vunpack.c.h.b16 %v52
    %v604 = vunpack.c.l.b16 %v53
    %v605 = vunpack.c.h.b16 %v53
    %v606 = vunpack.c.l.b16 %v54
    %v607 = vunpack.c.h.b16 %v54
    %v608 = vunpack.c.l.b16 %v55
    %v609 = vunpack.c.h.b16 %v55
    %v610 = vunpack.c.l.b16 %v56
    %v611 = vunpack.c.h.b16 %v56
    %v612 = vunpack.c.l.b16 %v57
    %v613 = vunpack.c.h.b16 %v57
    %v614 = vunpack.c.l.b16 %v58
    %v615 = vunpack.c.h.b16 %v58
    %v616 = vunpack.c.l.b16 %v59
    %v617 = vunpack.c.h.b16 %v59
    %v618 = vunpack.c.l.b16 %v60
    %v619 = vunpack.c.h.b16 %v60
    %v620 = vunpack.c.l.b16 %v61
    %v621 = vunpack.c.h.b16 %v61
    %v622 = vunpack.c.l.b16 %v62
    %v623 = vunpack.c.h.b16 %v62
    %v624 = vunpack.c.l.b16 %v63
    %v625 = vunpack.c.h.b16 %v63
    %v626 = vunpack.c.l.b16 %v64
    %v627 = vunpack.c.h.b16 %v64
    %v628 = vunpack.c.l.b16 %v65
    %v629 = vunpack.c.h.b16 %v65
    %v630 = vunpack.c.l.b16 %v66
    %v631 = vunpack.c.h.b16 %v66
    %v632 = vunpack.c.l.b16 %v67
    %v633 = vunpack.c.h.b16 %v67
    %v634 = vunpack.c.l.b16 %v68
    %v635 = vunpack.c.h.b16 %v68
    %v636 = vunpack.c.l.b16 %v69
    %v637 = vunpack.c.h.b16 %v69
    %v638 = vunpack.c.l.b16 %v70
    %v639 = vunpack.c.h.b16 %v70
    %v640 = vunpack.c.l.b16 %v71
    %v641 = vunpack.c.h.b16 %v71
    %v642 = vunpack.c.l.b16 %v72
    %v643 = vunpack.c.h.b16 %v72
    %v644 = vunpack.c.l.b16 %v73
    %v645 = vunpack.c.h.b16 %v73
    %v646 = vunpack.c.l.b16 %v74
    %v647 = vunpack.c.h.b16 %v74
    %v648 = vunpack.c.l.b16 %v75
    %v649 = vunpack.c.h.b16 %v75
    %v650 = vunpack.c.l.b16 %v76
    %v651 = vunpack.c.h.b16 %v76
    %v652 = vunpack.c.l.b16 %v77
    %v653 = vunpack.c.h.b16 %v77
    %v654 = vunpack.c.l.b16 %v78
    %v655 = vunpack.c.h.b16 %v78
    %v656 = vunpack.c.l.b16 %v79
    %v657 = vunpack.c.h.b16 %v79
    %v658 = vunpack.c.l.b16 %v80
    %v659 = vunpack.c.h.b16 %v80
    %v660 = vunpack.c.l.b16 %v81
    %v661 = vunpack.c.h.b16 %v81
    %v662 = vunpack.c.l.b16 %v82
    %v663 = vunpack.c.h.b16 %v82
    %v664 = vunpack.c.l.b16 %v83
    %v665 = vunpack.c.h.b16 %v83
    %v666 = vunpack.c.l.b16 %v84
    %v667 = vunpack.c.h.b16 %v84
    %v668 = vunpack.c.l.b16 %v85
    %v669 = vunpack.c.h.b16 %v85
    %v670 = vunpack.c.l.b16 %v86
    %v671 = vunpack.c.h.b16 %v86
    %v672 = vunpack.c.l.b16 %v87
    %v673 = vunpack.c.h.b16 %v87
    %v674 = vunpack.c.l.b16 %v88
    %v675 = vunpack.c.h.b16 %v88
    %v676 = vunpack.c.l.b16 %v89
    %v677 = vunpack.c.h.b16 %v89
    %v678 = vunpack.c.l.b16 %v90
    %v679 = vunpack.c.h.b16 %v90
    %v680 = vunpack.c.l.b16 %v91
    %v681 = vunpack.c.h.b16 %v91
    %v682 = vunpack.c.l.b16 %v92
    %v683 = vunpack.c.h.b16 %v92
    %v684 = vunpack.c.l.b16 %v93
    %v685 = vunpack.c.h.b16 %v93
    %v686 = vunpack.c.l.b16 %v94
    %v687 = vunpack.c.h.b16 %v94
    %v688 = vunpack.c.l.b16 %v95
    %v689 = vunpack.c.h.b16 %v95
    %v690 = vunpack.c.l.b16 %v96
    %v691 = vunpack.c.h.b16 %v96
    %v692 = vunpack.c.l.b16 %v97
    %v693 = vunpack.c.h.b16 %v97
    %v694 = vunpack.c.l.b16 %v98
    %v695 = vunpack.c.h.b16 %v98
    %v696 = vunpack.c.l.b16 %v99
    %v697 = vunpack.c.h.b16 %v99
    %v698 = vunpack.c.l.b16 %v100
    %v699 = vunpack.c.h.b16 %v100
    %v700 = vunpack.c.l.b16 %v101
    %v701 = vunpack.c.h.b16 %v101
    %v702 = vunpack.c.l.b16 %v102
    %v703 = vunpack.c.h.b16 %v102
    %v704 = vunpack.c.l.b16 %v103
    %v705 = vunpack.c.h.b16 %v103
    %v706 = vunpack.c.l.b16 %v104
    %v707 = vunpack.c.h.b16 %v104
    %v708 = vunpack.c.l.b16 %v105
    %v709 = vunpack.c.h.b16 %v105
    %v710 = vunpack.c.l.b16 %v106
    %v711 = vunpack.c.h.b16 %v106
    %v712 = vunpack.c.l.b16 %v107
    %v713 = vunpack.c.h.b16 %v107
    %v714 = vunpack.c.l.b16 %v108
    %v715 = vunpack.c.h.b16 %v108
    %v716 = vunpack.c.l.b16 %v109
    %v717 = vunpack.c.h.b16 %v109
    %v718 = vunpack.c.l.b16 %v110
    %v719 = vunpack.c.h.b16 %v110
    %v720 = vunpack.c.l.b16 %v111
    %v721 = vunpack.c.h.b16 %v111
    %v722 = vunpack.c.l.b16 %v112
    %v723 = vunpack.c.h.b16 %v112
    %v724 = vunpack.c.l.b16 %v113
    %v725 = vunpack.c.h.b16 %v113
    %v726 = vunpack.c.l.b16 %v114
    %v727 = vunpack.c.h.b16 %v114
    %v728 = vunpack.c.l.b16 %v115
    %v729 = vunpack.c.h.b16 %v115
    %v730 = vunpack.c.l.b16 %v116
    %v731 = vunpack.c.h.b16 %v116
    %v732 = vunpack.c.l.b16 %v117
    %v733 = vunpack.c.h.b16 %v117
    %v734 = vunpack.c.l.b16 %v118
    %v735 = vunpack.c.h.b16 %v118
    %v736 = vunpack.c.l.b16 %v119
    %v737 = vunpack.c.h.b16 %v119
    %v738 = vunpack.c.l.b16 %v120
    %v739 = vunpack.c.h.b16 %v120
    %v740 = vunpack.c.l.b16 %v121
    %v741 = vunpack.c.h.b16 %v121
    %v742 = vunpack.c.l.b16 %v122
    %v743 = vunpack.c.h.b16 %v122
    %v744 = vunpack.c.l.b16 %v123
    %v745 = vunpack.c.h.b16 %v123
    %v746 = vunpack.c.l.b16 %v124
    %v747 = vunpack.c.h.b16 %v124
    %v748 = vunpack.c.l.b16 %v125
    %v749 = vunpack.c.h.b16 %v125
    %v750 = vunpack.c.l.b16 %v126
    %v751 = vunpack.c.h.b16 %v126
    %v752 = vunpack.c.l.b16 %v127
    %v753 = vunpack.c.h.b16 %v127
    %v754 = vunpack.c.l.b16 %v128
    %v755 = vunpack.c.h.b16 %v128
    %v756 = vunpack.c.l.b16 %v129
    %v757 = vunpack.c.h.b16 %v129
    %v758 = vunpack.c.l.b16 %v130
    %v759 = vunpack.c.h.b16 %v130
    %v760 = vunpack.c.l.b16 %v131
    %v761 = vunpack.c.h.b16 %v131
    %v762 = vunpack.c.l.b16 %v132
    %v763 = vunpack.c.h.b16 %v132
    %v764 = vunpack.c.l.b16 %v133
    %v765 = vunpack.c.h.b16 %v133
    %v766 = vunpack.c.l.b16 %v134
    %v767 = vunpack.c.h.b16 %v134
    %v768 = vunpack.c.l.b16 %v135
    %v769 = vunpack.c.h.b16 %v135
    %v770 = vunpack.c.l.b16 %v136
    %v771 = vunpack.c.h.b16 %v136
    %v772 = vunpack.c.l.b16 %v137
    %v773 = vunpack.c.h.b16 %v137
    %v774 = vunpack.c.l.b16 %v138
    %v775 = vunpack.c.h.b16 %v138
    %v776 = vunpack.c.l.b16 %v139
    %v777 = vunpack.c.h.b16 %v139
    %v778 = vunpack.c.l.b16 %v140
    %v779 = vunpack.c.h.b16 %v140
    %v780 = vunpack.c.l.b16 %v141
    %v781 = vunpack.c.h.b16 %v141
    %v782 = vunpack.c.l.b16 %v142
    %v783 = vunpack.c.h.b16 %v142
    %v784 = vunpack.c.l.b16 %v143
    %v785 = vunpack.c.h.b16 %v143
    %v786 = vunpack.c.l.b16 %v144
    %v787 = vunpack.c.h.b16 %v144
    %v788 = vunpack.c.l.b16 %v145
    %v789 = vunpack.c.h.b16 %v145
    %v790 = vunpack.c.l.b16 %v146
    %v791 = vunpack.c.h.b16 %v146
    %v792 = vunpack.c.l.b16 %v147
    %v793 = vunpack.c.h.b16 %v147
    %v794 = vunpack.c.l.b16 %v148
    %v795 = vunpack.c.h.b16 %v148
    %v796 = vunpack.c.l.b16 %v149
    %v797 = vunpack.c.h.b16 %v149
    %v798 = vunpack.c.l.b16 %v150
    %v799 = vunpack.c.h.b16 %v150
    %v800 = vunpack.c.l.b16 %v151
    %v801 = vunpack.c.h.b16 %v151
    %v802 = vunpack.c.l.b16 %v152
    %v803 = vunpack.c.h.b16 %v152
    %v804 = vunpack.c.l.b16 %v153
    %v805 = vunpack.c.h.b16 %v153
    %v806 = vunpack.c.l.b16 %v154
    %v807 = vunpack.c.h.b16 %v154
    %v808 = vunpack.c.l.b16 %v155
    %v809 = vunpack.c.h.b16 %v155
    %v810 = vunpack.c.l.b16 %v156
    %v811 = vunpack.c.h.b16 %v156
    %v812 = vunpack.c.l.b16 %v157
    %v813 = vunpack.c.h.b16 %v157
    %v814 = vunpack.c.l.b16 %v158
    %v815 = vunpack.c.h.b16 %v158
    %v816 = vunpack.c.l.b16 %v159
    %v817 = vunpack.c.h.b16 %v159
    %v818 = vunpack.c.l.b16 %v160
    %v819 = vunpack.c.h.b16 %v160
    %v820 = vunpack.c.l.b16 %v161
    %v821 = vunpack.c.h.b16 %v161
    %v822 = vunpack.c.l.b16 %v162
    %v823 = vunpack.c.h.b16 %v162
    %v824 = vunpack.c.l.b16 %v163
    %v825 = vunpack.c.h.b16 %v163
    %v826 = vunpack.c.l.b16 %v164
    %v827 = vunpack.c.h.b16 %v164
    %v828 = vunpack.c.l.b16 %v165
    %v829 = vunpack.c.h.b16 %v165
    %v830 = vunpack.c.l.b16 %v166
    %v831 = vunpack.c.h.b16 %v166
    %v832 = vunpack.c.l.b16 %v167
    %v833 = vunpack.c.h.b16 %v167
    %v834 = vunpack.c.l.b16 %v168
    %v835 = vunpack.c.h.b16 %v168
    %v836 = vunpack.c.l.b16 %v169
    %v837 = vunpack.c.h.b16 %v169
    %v838 = vunpack.c.l.b16 %v170
    %v839 = vunpack.c.h.b16 %v170
    %v840 = vunpack.c.l.b16 %v171
    %v841 = vunpack.c.h.b16 %v171
    %v842 = vunpack.c.l.b16 %v172
    %v843 = vunpack.c.h.b16 %v172
    %v844 = vunpack.c.l.b16 %v173
    %v845 = vunpack.c.h.b16 %v173
    %v846 = vunpack.c.l.b16 %v174
    %v847 = vunpack.c.h.b16 %v174
    %v848 = vunpack.c.l.b16 %v175
    %v849 = vunpack.c.h.b16 %v175
    %v850 = vunpack.c.l.b16 %v176
    %v851 = vunpack.c.h.b16 %v176
    %v852 = vunpack.c.l.b16 %v177
    %v853 = vunpack.c.h.b16 %v177
    %v854 = vunpack.c.l.b16 %v178
    %v855 = vunpack.c.h.b16 %v178
    %v856 = vunpack.c.l.b16 %v179
    %v857 = vunpack.c.h.b16 %v179
    %v858 = vunpack.c.l.b16 %v180
    %v859 = vunpack.c.h.b16 %v180
    %v860 = vunpack.c.l.b16 %v181
    %v861 = vunpack.c.h.b16 %v181
    %v862 = vunpack.c.l.b16 %v182
    %v863 = vunpack.c.h.b16 %v182
    %v864 = vunpack.c.l.b16 %v183
    %v865 = vunpack.c.h.b16 %v183
    %v866 = vunpack.c.l.b16 %v184
    %v867 = vunpack.c.h.b16 %v184
    %v868 = vunpack.c.l.b16 %v185
    %v869 = vunpack.c.h.b16 %v185
    %v870 = vunpack.c.l.b16 %v186
    %v871 = vunpack.c.h.b16 %v186
    %v872 = vunpack.c.l.b16 %v187
    %v873 = vunpack.c.h.b16 %v187
    %v874 = vunpack.c.l.b16 %v188
    %v875 = vunpack.c.h.b16 %v188
    %v876 = vunpack.c.l.b16 %v189
    %v877 = vunpack.c.h.b16 %v189
    %v878 = vunpack.c.l.b16 %v190
    %v879 = vunpack.c.h.b16 %v190
    %v880 = vunpack.c.l.b16 %v191
    %v881 = vunpack.c.h.b16 %v191
    %v882 = vunpack.c.l.b16 %v192
    %v883 = vunpack.c.h.b16 %v192
    %v884 = vunpack.c.l.b16 %v193
    %v885 = vunpack.c.h.b16 %v193
    %v886 = vunpack.c.l.b16 %v194
    %v887 = vunpack.c.h.b16 %v194
    %v888 = vunpack.c.l.b16 %v195
    %v889 = vunpack.c.h.b16 %v195
    %v890 = vunpack.c.l.b16 %v196
    %v891 = vunpack.c.h.b16 %v196
    %v892 = vunpack.c.l.b16 %v197
    %v893 = vunpack.c.h.b16 %v197
    %v894 = vunpack.c.l.b16 %v198
    %v895 = vunpack.c.h.b16 %v198
    %v896 = vunpack.c.l.b16 %v199
    %v897 = vunpack.c.h.b16 %v199
    %v898 = vunpack.c.l.b16 %v200
    %v899 = vunpack.c.h.b16 %v200
    %v900 = vunpack.c.l.b16 %v201
    %v901 = vunpack.c.h.b16 %v201
    %v902 = vunpack.c.l.b16 %v202
    %v903 = vunpack.c.h.b16 %v202
    %v904 = vunpack.c.l.b16 %v203
    %v905 = vunpack.c.h.b16 %v203
    %v906 = vunpack.c.l.b16 %v204
    %v907 = vunpack.c.h.b16 %v204
    %v908 = vunpack.c.l.b16 %v205
    %v909 = vunpack.c.h.b16 %v205
    %v910 = vunpack.c.l.b16 %v206
    %v911 = vunpack.c.h.b16 %v206
    %v912 = vunpack.c.l.b16 %v207
    %v913 = vunpack.c.h.b16 %v207
    %v914 = vunpack.c.l.b16 %v208
    %v915 = vunpack.c.h.b16 %v208
    %v916 = vunpack.c.l.b16 %v209
    %v917 = vunpack.c.h.b16 %v209
    %v918 = vunpack.c.l.b16 %v210
    %v919 = vunpack.c.h.b16 %v210
    %v920 = vunpack.c.l.b16 %v211
    %v921 = vunpack.c.h.b16 %v211
    %v922 = vunpack.c.l.b16 %v212
    %v923 = vunpack.c.h.b16 %v212
    %v924 = vunpack.c.l.b16 %v213
    %v925 = vunpack.c.h.b16 %v213
    %v926 = vunpack.c.l.b16 %v214
    %v927 = vunpack.c.h.b16 %v214
    %v928 = vunpack.c.l.b16 %v215
    %v929 = vunpack.c.h.b16 %v215
    %v930 = vunpack.c.l.b16 %v216
    %v931 = vunpack.c.h.b16 %v216
    %v932 = vunpack.c.l.b16 %v217
    %v933 = vunpack.c.h.b16 %v217
    %v934 = vunpack.c.l.b16 %v218
    %v935 = vunpack.c.h.b16 %v218
    %v936 = vunpack.c.l.b16 %v219
    %v937 = vunpack.c.h.b16 %v219
    %v938 = vunpack.c.l.b16 %v220
    %v939 = vunpack.c.h.b16 %v220
    %v940 = vunpack.c.l.b16 %v221
    %v941 = vunpack.c.h.b16 %v221
    %v942 = vunpack.c.l.b16 %v222
    %v943 = vunpack.c.h.b16 %v222
    %v944 = vunpack.c.l.b16 %v223
    %v945 = vunpack.c.h.b16 %v223
    %v946 = vunpack.c.l.b16 %v224
    %v947 = vunpack.c.h.b16 %v224
    %v948 = vunpack.c.l.b16 %v225
    %v949 = vunpack.c.h.b16 %v225
    %v950 = vunpack.c.l.b16 %v226
    %v951 = vunpack.c.h.b16 %v226
    %v952 = vunpack.c.l.b16 %v227
    %v953 = vunpack.c.h.b16 %v227
    %v954 = vunpack.c.l.b16 %v228
    %v955 = vunpack.c.h.b16 %v228
    %v956 = vunpack.c.l.b16 %v229
    %v957 = vunpack.c.h.b16 %v229
    %v958 = vunpack.c.l.b16 %v230
    %v959 = vunpack.c.h.b16 %v230
    %v960 = vunpack.c.l.b16 %v231
    %v961 = vunpack.c.h.b16 %v231
    %v962 = vunpack.c.l.b16 %v232
    %v963 = vunpack.c.h.b16 %v232
    %v964 = vunpack.c.l.b16 %v233
    %v965 = vunpack.c.h.b16 %v233
    %v966 = vunpack.c.l.b16 %v234
    %v967 = vunpack.c.h.b16 %v234
    %v968 = vunpack.c.l.b16 %v235
    %v969 = vunpack.c.h.b16 %v235
    %v970 = vunpack.c.l.b16 %v236
    %v971 = vunpack.c.h.b16 %v236
    %v972 = vunpack.c.l.b16 %v237
    %v973 = vunpack.c.h.b16 %v237
    %v974 = vunpack.c.l.b16 %v238
    %v975 = vunpack.c.h.b16 %v238
    %v976 = vunpack.c.l.b16 %v239
    %v977 = vunpack.c.h.b16 %v239
    %v978 = vunpack.c.l.b16 %v240
    %v979 = vunpack.c.h.b16 %v240
    %v980 = vunpack.c.l.b16 %v241
    %v981 = vunpack.c.h.b16 %v241
    %v982 = vunpack.c.l.b16 %v242
    %v983 = vunpack.c.h.b16 %v242
    %v984 = vunpack.c.l.b16 %v243
    %v985 = vunpack.c.h.b16 %v243
    %v986 = vunpack.c.l.b16 %v244
    %v987 = vunpack.c.h.b16 %v244
    %v988 = vunpack.c.l.b16 %v245
    %v989 = vunpack.c.h.b16 %v245
    %v990 = vunpack.c.l.b16 %v246
    %v991 = vunpack.c.h.b16 %v246
    %v992 = vunpack.c.l.b16 %v247
    %v993 = vunpack.c.h.b16 %v247
    %v994 = vunpack.c.l.b16 %v248
    %v995 = vunpack.c.h.b16 %v248
    %v996 = vunpack.c.l.b16 %v249
    %v997 = vunpack.c.h.b16 %v249
    %v998 = vunpack.c.l.b16 %v250
    %v999 = vunpack.c.h.b16 %v250
    %v1000 = vunpack.c.l.b16 %v251
    %v1001 = vunpack.c.h.b16 %v251
    %v1002 = vunpack.c.l.b16 %v252
    %v1003 = vunpack.c.h.b16 %v252
    %v1004 = vunpack.c.l.b16 %v253
    %v1005 = vunpack.c.h.b16 %v253
    %v1006 = vunpack.c.l.b16 %v254
    %v1007 = vunpack.c.h.b16 %v254
    %v1008 = vunpack.c.l.b16 %v255
    %v1009 = vunpack.c.h.b16 %v255
    %v1010 = vunpack.c.l.b16 %v256
    %v1011 = vunpack.c.h.b16 %v256
    %v1012 = vunpack.c.l.b16 %v257
    %v1013 = vunpack.c.h.b16 %v257
    %v1014 = vunpack.c.l.b16 %v258
    %v1015 = vunpack.c.h.b16 %v258
    %v1016 = vunpack.c.l.b16 %v259
    %v1017 = vunpack.c.h.b16 %v259
    %v1018 = vunpack.c.l.b16 %v260
    %v1019 = vunpack.c.h.b16 %v260
    %v1020 = vunpack.c.l.b16 %v261
    %v1021 = vunpack.c.h.b16 %v261
    %v1022 = vunpack.c.l.b16 %v262
    %v1023 = vunpack.c.h.b16 %v262
    %v1024 = vunpack.c.l.b16 %v263
    %v1025 = vunpack.c.h.b16 %v263
    %v1026 = vunpack.c.l.b16 %v264
    %v1027 = vunpack.c.h.b16 %v264
    %v1028 = vunpack.c.l.b16 %v265
    %v1029 = vunpack.c.h.b16 %v265
    %v1030 = vunpack.c.l.b16 %v266
    %v1031 = vunpack.c.h.b16 %v266
    %v1032 = vunpack.c.l.b16 %v267
    %v1033 = vunpack.c.h.b16 %v267
    %v1034 = vunpack.c.l.b16 %v268
    %v1035 = vunpack.c.h.b16 %v268
    %v1036 = vunpack.c.l.b16 %v269
    %v1037 = vunpack.c.h.b16 %v269
    %v1038 = vunpack.c.l.b16 %v270
    %v1039 = vunpack.c.h.b16 %v270
    %v1040 = vunpack.c.l.b16 %v271
    %v1041 = vunpack.c.h.b16 %v271
    %v1042 = vunpack.c.l.b16 %v272
    %v1043 = vunpack.c.h.b16 %v272
    %v1044 = vunpack.c.l.b16 %v273
    %v1045 = vunpack.c.h.b16 %v273
    %v1046 = vunpack.c.l.b16 %v274
    %v1047 = vunpack.c.h.b16 %v274
    %v1048 = vunpack.c.l.b16 %v275
    %v1049 = vunpack.c.h.b16 %v275
    %v1050 = vunpack.c.l.b16 %v276
    %v1051 = vunpack.c.h.b16 %v276
    %v1052 = vunpack.c.l.b16 %v277
    %v1053 = vunpack.c.h.b16 %v277
    %v1054 = vunpack.c.l.b16 %v278
    %v1055 = vunpack.c.h.b16 %v278
    %v1056 = vunpack.c.l.b16 %v279
    %v1057 = vunpack.c.h.b16 %v279
    %v1058 = vunpack.c.l.b16 %v280
    %v1059 = vunpack.c.h.b16 %v280
    %v1060 = vunpack.c.l.b16 %v281
    %v1061 = vunpack.c.h.b16 %v281
    %v1062 = vunpack.c.l.b16 %v282
    %v1063 = vunpack.c.h.b16 %v282
    %v1064 = vunpack.c.l.b16 %v283
    %v1065 = vunpack.c.h.b16 %v283
    %v1066 = vunpack.c.l.b16 %v284
    %v1067 = vunpack.c.h.b16 %v284
    %v1068 = vunpack.c.l.b16 %v285
    %v1069 = vunpack.c.h.b16 %v285
    %v1070 = vunpack.c.l.b16 %v286
    %v1071 = vunpack.c.h.b16 %v286
    %v1072 = vunpack.c.l.b16 %v287
    %v1073 = vunpack.c.h.b16 %v287
    %v1074 = vunpack.c.l.b16 %v288
    %v1075 = vunpack.c.h.b16 %v288
    %v1076 = vunpack.c.l.b16 %v289
    %v1077 = vunpack.c.h.b16 %v289
    %v1078 = vunpack.c.l.b16 %v290
    %v1079 = vunpack.c.h.b16 %v290
    %v1080 = vunpack.c.l.b16 %v291
    %v1081 = vunpack.c.h.b16 %v291
    %v1082 = vunpack.c.l.b16 %v292
    %v1083 = vunpack.c.h.b16 %v292
    %v1084 = vunpack.c.l.b16 %v293
    %v1085 = vunpack.c.h.b16 %v293
    %v1086 = vunpack.c.l.b16 %v294
    %v1087 = vunpack.c.h.b16 %v294
    %v1088 = vunpack.c.l.b16 %v295
    %v1089 = vunpack.c.h.b16 %v295
    %v1090 = vunpack.c.l.b16 %v296
    %v1091 = vunpack.c.h.b16 %v296
    %v1092 = vunpack.c.l.b16 %v297
    %v1093 = vunpack.c.h.b16 %v297
    %v1094 = vunpack.c.l.b16 %v298
    %v1095 = vunpack.c.h.b16 %v298
    %v1096 = vunpack.c.l.b16 %v299
    %v1097 = vunpack.c.h.b16 %v299
    %v1098 = vunpack.c.l.b16 %v300
    %v1099 = vunpack.c.h.b16 %v300
    %v1100 = vunpack.c.l.b16 %v301
    %v1101 = vunpack.c.h.b16 %v301
    %v1102 = vunpack.c.l.b16 %v302
    %v1103 = vunpack.c.h.b16 %v302
    %v1104 = vunpack.c.l.b16 %v303
    %v1105 = vunpack.c.h.b16 %v303
    %v1106 = vunpack.c.l.b16 %v304
    %v1107 = vunpack.c.h.b16 %v304
    %v1108 = vunpack.c.l.b16 %v305
    %v1109 = vunpack.c.h.b16 %v305
    %v1110 = vunpack.c.l.b16 %v306
    %v1111 = vunpack.c.h.b16 %v306
    %v1112 = vunpack.c.l.b16 %v307
    %v1113 = vunpack.c.h.b16 %v307
    %v1114 = vpack.c.b16 %v606, %v602
    %v1115 = vpack.c.b16 %v607, %v603
    %v1116 = vpack.c.b16 %v608, %v604
    %v1117 = vpack.c.b16 %v609, %v605
    %v1118 = vpack.c.b16 %v614, %v610
    %v1119 = vpack.c.b16 %v615, %v611
    %v1120 = vpack.c.b16 %v616, %v612
    %v1121 = vpack.c.b16 %v617, %v613
    %v1122 = vpack.c.b16 %v622, %v618
    %v1123 = vpack.c.b16 %v623, %v619
    %v1124 = vpack.c.b16 %v624, %v620
    %v1125 = vpack.c.b16 %v625, %v621
    %v1126 = vpack.c.b16 %v630, %v626
    %v1127 = vpack.c.b16 %v631, %v627
    %v1128 = vpack.c.b16 %v632, %v628
    %v1129 = vpack.c.b16 %v633, %v629
    %v1130 = vpack.c.b16 %v638, %v634
    %v1131 = vpack.c.b16 %v639, %v635
    %v1132 = vpack.c.b16 %v640, %v636
    %v1133 = vpack.c.b16 %v641, %v637
    %v1134 = vpack.c.b16 %v646, %v642
    %v1135 = vpack.c.b16 %v647, %v643
    %v1136 = vpack.c.b16 %v648, %v644
    %v1137 = vpack.c.b16 %v649, %v645
    %v1138 = vpack.c.b16 %v654, %v650
    %v1139 = vpack.c.b16 %v655, %v651
    %v1140 = vpack.c.b16 %v656, %v652
    %v1141 = vpack.c.b16 %v657, %v653
    %v1142 = vpack.c.b16 %v662, %v658
    %v1143 = vpack.c.b16 %v663, %v659
    %v1144 = vpack.c.b16 %v664, %v660
    %v1145 = vpack.c.b16 %v665, %v661
    %v1146 = vpack.c.b16 %v670, %v666
    %v1147 = vpack.c.b16 %v671, %v667
    %v1148 = vpack.c.b16 %v672, %v668
    %v1149 = vpack.c.b16 %v673, %v669
    %v1150 = vpack.c.b16 %v678, %v674
    %v1151 = vpack.c.b16 %v679, %v675
    %v1152 = vpack.c.b16 %v680, %v676
    %v1153 = vpack.c.b16 %v681, %v677
    %v1154 = vpack.c.b16 %v686, %v682
    %v1155 = vpack.c.b16 %v687, %v683
    %v1156 = vpack.c.b16 %v688, %v684
    %v1157 = vpack.c.b16 %v689, %v685
    %v1158 = vpack.c.b16 %v694, %v690
    %v1159 = vpack.c.b16 %v695, %v691
    %v1160 = vpack.c.b16 %v696, %v692
    %v1161 = vpack.c.b16 %v697, %v693
    %v1162 = vpack.c.b16 %v702, %v698
    %v1163 = vpack.c.b16 %v703, %v699
    %v1164 = vpack.c.b16 %v704, %v700
    %v1165 = vpack.c.b16 %v705, %v701
    %v1166 = vpack.c.b16 %v710, %v706
    %v1167 = vpack.c.b16 %v711, %v707
    %v1168 = vpack.c.b16 %v712, %v708
    %v1169 = vpack.c.b16 %v713, %v709
    %v1170 = vpack.c.b16 %v718, %v714
    %v1171 = vpack.c.b16 %v719, %v715
    %v1172 = vpack.c.b16 %v720, %v716
    %v1173 = vpack.c.b16 %v721, %v717
    %v1174 = vpack.c.b16 %v726, %v722
    %v1175 = vpack.c.b16 %v727, %v723
    %v1176 = vpack.c.b16 %v728, %v724
    %v1177 = vpack.c.b16 %v729, %v725
    %v1178 = vpack.c.b16 %v734, %v730
    %v1179 = vpack.c.b16 %v735, %v731
    %v1180 = vpack.c.b16 %v736, %v732
    %v1181 = vpack.c.b16 %v737, %v733
    %v1182 = vpack.c.b16 %v742, %v738
    %v1183 = vpack.c.b16 %v743, %v739
    %v1184 = vpack.c.b16 %v744, %v740
    %v1185 = vpack.c.b16 %v745, %v741
    %v1186 = vpack.c.b16 %v750, %v746
    %v1187 = vpack.c.b16 %v751, %v747
    %v1188 = vpack.c.b16 %v752, %v748
    %v1189 = vpack.c.b16 %v753, %v749
    %v1190 = vpack.c.b16 %v758, %v754
    %v1191 = vpack.c.b16 %v759, %v755
    %v1192 = vpack.c.b16 %v760, %v756
    %v1193 = vpack.c.b16 %v761, %v757
    %v1194 = vpack.c.b16 %v766, %v762
    %v1195 = vpack.c.b16 %v767, %v763
    %v1196 = vpack.c.b16 %v768, %v764
    %v1197 = vpack.c.b16 %v769, %v765
    %v1198 = vpack.c.b16 %v774, %v770
    %v1199 = vpack.c.b16 %v775, %v771
    %v1200 = vpack.c.b16 %v776, %v772
    %v1201 = vpack.c.b16 %v777, %v773
    %v1202 = vpack.c.b16 %v782, %v778
    %v1203 = vpack.c.b16 %v783, %v779
    %v1204 = vpack.c.b16 %v784, %v780
    %v1205 = vpack.c.b16 %v785, %v781
    %v1206 = vpack.c.b16 %v790, %v786
    %v1207 = vpack.c.b16 %v791, %v787
    %v1208 = vpack.c.b16 %v792, %v788
    %v1209 = vpack.c.b16 %v793, %v789
    %v1210 = vpack.c.b16 %v798, %v794
    %v1211 = vpack.c.b16 %v799, %v795
    %v1212 = vpack.c.b16 %v800, %v796
    %v1213 = vpack.c.b16 %v801, %v797
    %v1214 = vpack.c.b16 %v806, %v802
    %v1215 = vpack.c.b16 %v807, %v803
    %v1216 = vpack.c.b16 %v808, %v804
    %v1217 = vpack.c.b16 %v809, %v805
    %v1218 = vpack.c.b16 %v814, %v810
    %v1219 = vpack.c.b16 %v815, %v811
    %v1220 = vpack.c.b16 %v816, %v812
    %v1221 = vpack.c.b16 %v817, %v813
    %v1222 = vpack.c.b16 %v822, %v818
    %v1223 = vpack.c.b16 %v823, %v819
    %v1224 = vpack.c.b16 %v824, %v820
    %v1225 = vpack.c.b16 %v825, %v821
    %v1226 = vpack.c.b16 %v830, %v826
    %v1227 = vpack.c.b16 %v831, %v827
    %v1228 = vpack.c.b16 %v832, %v828
    %v1229 = vpack.c.b16 %v833, %v829
    %v1230 = vpack.c.b16 %v838, %v834
    %v1231 = vpack.c.b16 %v839, %v835
    %v1232 = vpack.c.b16 %v840, %v836
    %v1233 = vpack.c.b16 %v841, %v837
    %v1234 = vpack.c.b16 %v846, %v842
    %v1235 = vpack.c.b16 %v847, %v843
    %v1236 = vpack.c.b16 %v848, %v844
    %v1237 = vpack.c.b16 %v849, %v845
    %v1238 = vpack.c.b16 %v854, %v850
    %v1239 = vpack.c.b16 %v855, %v851
    %v1240 = vpack.c.b16 %v856, %v852
    %v1241 = vpack.c.b16 %v857, %v853
    %v1242 = vpack.c.b16 %v862, %v858
    %v1243 = vpack.c.b16 %v863, %v859
    %v1244 = vpack.c.b16 %v864, %v860
    %v1245 = vpack.c.b16 %v865, %v861
    %v1246 = vpack.c.b16 %v870, %v866
    %v1247 = vpack.c.b16 %v871, %v867
    %v1248 = vpack.c.b16 %v872, %v868
    %v1249 = vpack.c.b16 %v873, %v869
    %v1250 = vpack.c.b16 %v878, %v874
    %v1251 = vpack.c.b16 %v879, %v875
    %v1252 = vpack.c.b16 %v880, %v876
    %v1253 = vpack.c.b16 %v881, %v877
    %v1254 = vpack.c.b16 %v886, %v882
    %v1255 = vpack.c.b16 %v887, %v883
    %v1256 = vpack.c.b16 %v888, %v884
    %v1257 = vpack.c.b16 %v889, %v885
    %v1258 = vpack.c.b16 %v894, %v890
    %v1259 = vpack.c.b16 %v895, %v891
    %v1260 = vpack.c.b16 %v896, %v892
    %v1261 = vpack.c.b16 %v897, %v893
    %v1262 = vpack.c.b16 %v902, %v898
    %v1263 = vpack.c.b16 %v903, %v899
    %v1264 = vpack.c.b16 %v904, %v900
    %v1265 = vpack.c.b16 %v905, %v901
    %v1266 = vpack.c.b16 %v910, %v906
    %v1267 = vpack.c.b16 %v911, %v907
    %v1268 = vpack.c.b16 %v912, %v908
    %v1269 = vpack.c.b16 %v913, %v909
    %v1270 = vpack.c.b16 %v918, %v914
    %v1271 = vpack.c.b16 %v919, %v915
    %v1272 = vpack.c.b16 %v920, %v916
    %v1273 = vpack.c.b16 %v921, %v917
    %v1274 = vpack.c.b16 %v926, %v922
    %v1275 = vpack.c.b16 %v927, %v923
    %v1276 = vpack.c.b16 %v928, %v924
    %v1277 = vpack.c.b16 %v929, %v925
    %v1278 = vpack.c.b16 %v934, %v930
    %v1279 = vpack.c.b16 %v935, %v931
    %v1280 = vpack.c.b16 %v936, %v932
    %v1281 = vpack.c.b16 %v937, %v933
    %v1282 = vpack.c.b16 %v942, %v938
    %v1283 = vpack.c.b16 %v943, %v939
    %v1284 = vpack.c.b16 %v944, %v940
    %v1285 = vpack.c.b16 %v945, %v941
    %v1286 = vpack.c.b16 %v950, %v946
    %v1287 = vpack.c.b16 %v951, %v947
    %v1288 = vpack.c.b16 %v952, %v948
    %v1289 = vpack.c.b16 %v953, %v949
    %v1290 = vpack.c.b16 %v958, %v954
    %v1291 = vpack.c.b16 %v959, %v955
    %v1292 = vpack.c.b16 %v960, %v956
    %v1293 = vpack.c.b16 %v961, %v957
    %v1294 = vpack.c.b16 %v966, %v962
    %v1295 = vpack.c.b16 %v967, %v963
    %v1296 = vpack.c.b16 %v968, %v964
    %v1297 = vpack.c.b16 %v969, %v965
    %v1298 = vpack.c.b16 %v974, %v970
    %v1299 = vpack.c.b16 %v975, %v971
    %v1300 = vpack.c.b16 %v976, %v972
    %v1301 = vpack.c.b16 %v977, %v973
    %v1302 = vpack.c.b16 %v982, %v978
    %v1303 = vpack.c.b16 %v983, %v979
    %v1304 = vpack.c.b16 %v984, %v980
    %v1305 = vpack.c.b16 %v985, %v981
    %v1306 = vpack.c.b16 %v990, %v986
    %v1307 = vpack.c.b16 %v991, %v987
    %v1308 = vpack.c.b16 %v992, %v988
    %v1309 = vpack.c.b16 %v993, %v989
    %v1310 = vpack.c.b16 %v998, %v994
    %v1311 = vpack.c.b16 %v999, %v995
    %v1312 = vpack.c.b16 %v1000, %v996
    %v1313 = vpack.c.b16 %v1001, %v997
    %v1314 = vpack.c.b16 %v1006, %v1002
    %v1315 = vpack.c.b16 %v1007, %v1003
    %v1316 = vpack.c.b16 %v1008, %v1004
    %v1317 = vpack.c.b16 %v1009, %v1005
    %v1318 = vpack.c.b16 %v1014, %v1010
    %v1319 = vpack.c.b16 %v1015, %v1011
    %v1320 = vpack.c.b16 %v1016, %v1012
    %v1321 = vpack.c.b16 %v1017, %v1013
    %v1322 = vpack.c.b16 %v1022, %v1018
    %v1323 = vpack.c.b16 %v1023, %v1019
    %v1324 = vpack.c.b16 %v1024, %v1020
    %v1325 = vpack.c.b16 %v1025, %v1021
    %v1326 = vpack.c.b16 %v1030, %v1026
    %v1327 = vpack.c.b16 %v1031, %v1027
    %v1328 = vpack.c.b16 %v1032, %v1028
    %v1329 = vpack.c.b16 %v1033, %v1029
    %v1330 = vpack.c.b16 %v1038, %v1034
    %v1331 = vpack.c.b16 %v1039, %v1035
    %v1332 = vpack.c.b16 %v1040, %v1036
    %v1333 = vpack.c.b16 %v1041, %v1037
    %v1334 = vpack.c.b16 %v1046, %v1042
    %v1335 = vpack.c.b16 %v1047, %v1043
    %v1336 = vpack.c.b16 %v1048, %v1044
    %v1337 = vpack.c.b16 %v1049, %v1045
    %v1338 = vpack.c.b16 %v1054, %v1050
    %v1339 = vpack.c.b16 %v1055, %v1051
    %v1340 = vpack.c.b16 %v1056, %v1052
    %v1341 = vpack.c.b16 %v1057, %v1053
    %v1342 = vpack.c.b16 %v1062, %v1058
    %v1343 = vpack.c.b16 %v1063, %v1059
    %v1344 = vpack.c.b16 %v1064, %v1060
    %v1345 = vpack.c.b16 %v1065, %v1061
    %v1346 = vpack.c.b16 %v1070, %v1066
    %v1347 = vpack.c.b16 %v1071, %v1067
    %v1348 = vpack.c.b16 %v1072, %v1068
    %v1349 = vpack.c.b16 %v1073, %v1069
    %v1350 = vpack.c.b16 %v1078, %v1074
    %v1351 = vpack.c.b16 %v1079, %v1075
    %v1352 = vpack.c.b16 %v1080, %v1076
    %v1353 = vpack.c.b16 %v1081, %v1077
    %v1354 = vpack.c.b16 %v1086, %v1082
    %v1355 = vpack.c.b16 %v1087, %v1083
    %v1356 = vpack.c.b16 %v1088, %v1084
    %v1357 = vpack.c.b16 %v1089, %v1085
    %v1358 = vpack.c.b16 %v1094, %v1090
    %v1359 = vpack.c.b16 %v1095, %v1091
    %v1360 = vpack.c.b16 %v1096, %v1092
    %v1361 = vpack.c.b16 %v1097, %v1093
    %v1362 = vpack.c.b16 %v1102, %v1098
    %v1363 = vpack.c.b16 %v1103, %v1099
    %v1364 = vpack.c.b16 %v1104, %v1100
    %v1365 = vpack.c.b16 %v1105, %v1101
    %v1366 = vpack.c.b16 %v1110, %v1106
    %v1367 = vpack.c.b16 %v1111, %v1107
    %v1368 = vpack.c.b16 %v1112, %v1108
    %v1369 = vpack.c.b16 %v1113, %v1109
    %1626 = vmatpush.bf16.msra.mxu0 %v1142
    %1627 = vmatpush.bf16.msra.mxu0 %v1138
    %1628 = vmatpush.bf16.msra.mxu0 %v1134
    %1629 = vmatpush.bf16.msra.mxu0 %v1130
    %1630 = vmatpush.bf16.msra.mxu0 %v1126
    %1631 = vmatpush.bf16.msra.mxu0 %v1122
    %1632 = vmatpush.bf16.msra.mxu0 %v1118
    %1633 = vmatpush.bf16.msra.mxu0 %v1114
    %1634 = vmatmul.bf16.gmra.mxu0 %v330
    %v1635 = vpop.f32.mrf.mxu0
    %v1636 = vadd.f32 %v310, %v1635
    %v1637 = vpop.f32.mrf.mxu0
    %1638 = vdwg.mxu0
    %1639 = vmatpush.bf16.msra.mxu0 %v1174
    %1640 = vmatpush.bf16.msra.mxu0 %v1170
    %1641 = vmatpush.bf16.msra.mxu0 %v1166
    %1642 = vmatpush.bf16.msra.mxu0 %v1162
    %1643 = vmatpush.bf16.msra.mxu0 %v1158
    %1644 = vmatpush.bf16.msra.mxu0 %v1154
    %1645 = vmatpush.bf16.msra.mxu0 %v1150
    %1646 = vmatpush.bf16.msra.mxu0 %v1146
    %1647 = vmatmul.bf16.gmra.mxu0 %v331
    %v1648 = vpop.f32.mrf.mxu0
    %v1649 = vadd.f32 %v1636, %v1648
    %v1650 = vpop.f32.mrf.mxu0
    %1651 = vdwg.mxu0
    %1652 = vmatpush.bf16.msra.mxu0 %v1206
    %1653 = vmatpush.bf16.msra.mxu0 %v1202
    %1654 = vmatpush.bf16.msra.mxu0 %v1198
    %1655 = vmatpush.bf16.msra.mxu0 %v1194
    %1656 = vmatpush.bf16.msra.mxu0 %v1190
    %1657 = vmatpush.bf16.msra.mxu0 %v1186
    %1658 = vmatpush.bf16.msra.mxu0 %v1182
    %1659 = vmatpush.bf16.msra.mxu0 %v1178
    %1660 = vmatmul.bf16.gmra.mxu0 %v332
    %v1661 = vpop.f32.mrf.mxu0
    %v1662 = vadd.f32 %v1649, %v1661
    %v1663 = vpop.f32.mrf.mxu0
    %1664 = vdwg.mxu0
    %1665 = vmatpush.bf16.msra.mxu0 %v1238
    %1666 = vmatpush.bf16.msra.mxu0 %v1234
    %1667 = vmatpush.bf16.msra.mxu0 %v1230
    %1668 = vmatpush.bf16.msra.mxu0 %v1226
    %1669 = vmatpush.bf16.msra.mxu0 %v1222
    %1670 = vmatpush.bf16.msra.mxu0 %v1218
    %1671 = vmatpush.bf16.msra.mxu0 %v1214
    %1672 = vmatpush.bf16.msra.mxu0 %v1210
    %1673 = vmatmul.bf16.gmra.mxu0 %v333
    %v1674 = vpop.f32.mrf.mxu0
    %v1675 = vadd.f32 %v1662, %v1674
    %v1676 = vpop.f32.mrf.mxu0
    %1677 = vdwg.mxu0
    %1678 = vmatpush.bf16.msra.mxu0 %v1270
    %1679 = vmatpush.bf16.msra.mxu0 %v1266
    %1680 = vmatpush.bf16.msra.mxu0 %v1262
    %1681 = vmatpush.bf16.msra.mxu0 %v1258
    %1682 = vmatpush.bf16.msra.mxu0 %v1254
    %1683 = vmatpush.bf16.msra.mxu0 %v1250
    %1684 = vmatpush.bf16.msra.mxu0 %v1246
    %1685 = vmatpush.bf16.msra.mxu0 %v1242
    %1686 = vmatmul.bf16.gmra.mxu0 %v334
    %v1687 = vpop.f32.mrf.mxu0
    %v1688 = vadd.f32 %v1675, %v1687
    %v1689 = vpop.f32.mrf.mxu0
    %1690 = vdwg.mxu0
    %1691 = vmatpush.bf16.msra.mxu0 %v1302
    %1692 = vmatpush.bf16.msra.mxu0 %v1298
    %1693 = vmatpush.bf16.msra.mxu0 %v1294
    %1694 = vmatpush.bf16.msra.mxu0 %v1290
    %1695 = vmatpush.bf16.msra.mxu0 %v1286
    %1696 = vmatpush.bf16.msra.mxu0 %v1282
    %1697 = vmatpush.bf16.msra.mxu0 %v1278
    %1698 = vmatpush.bf16.msra.mxu0 %v1274
    %1699 = vmatmul.bf16.gmra.mxu0 %v335
    %v1700 = vpop.f32.mrf.mxu0
    %v1701 = vadd.f32 %v1688, %v1700
    %v1702 = vpop.f32.mrf.mxu0
    %1703 = vdwg.mxu0
    %1704 = vmatpush.bf16.msra.mxu0 %v1334
    %1705 = vmatpush.bf16.msra.mxu0 %v1330
    %1706 = vmatpush.bf16.msra.mxu0 %v1326
    %1707 = vmatpush.bf16.msra.mxu0 %v1322
    %1708 = vmatpush.bf16.msra.mxu0 %v1318
    %1709 = vmatpush.bf16.msra.mxu0 %v1314
    %1710 = vmatpush.bf16.msra.mxu0 %v1310
    %1711 = vmatpush.bf16.msra.mxu0 %v1306
    %1712 = vmatmul.bf16.gmra.mxu0 %v336
    %v1713 = vpop.f32.mrf.mxu0
    %v1714 = vadd.f32 %v1701, %v1713
    %v1715 = vpop.f32.mrf.mxu0
    %1716 = vdwg.mxu0
    %1717 = vmatpush.bf16.msra.mxu0 %v1366
    %1718 = vmatpush.bf16.msra.mxu0 %v1362
    %1719 = vmatpush.bf16.msra.mxu0 %v1358
    %1720 = vmatpush.bf16.msra.mxu0 %v1354
    %1721 = vmatpush.bf16.msra.mxu0 %v1350
    %1722 = vmatpush.bf16.msra.mxu0 %v1346
    %1723 = vmatpush.bf16.msra.mxu0 %v1342
    %1724 = vmatpush.bf16.msra.mxu0 %v1338
    %1725 = vmatmul.bf16.gmra.mxu0 %v337
    %v1726 = vpop.f32.mrf.mxu0
    %v1727 = vadd.f32 %v1714, %v1726
    %v1728 = vpop.f32.mrf.mxu0
    %1729 = vdwg.mxu0
    %1730 = vmatpush.bf16.msra.mxu0 %v1143
    %1731 = vmatpush.bf16.msra.mxu0 %v1139
    %1732 = vmatpush.bf16.msra.mxu0 %v1135
    %1733 = vmatpush.bf16.msra.mxu0 %v1131
    %1734 = vmatpush.bf16.msra.mxu0 %v1127
    %1735 = vmatpush.bf16.msra.mxu0 %v1123
    %1736 = vmatpush.bf16.msra.mxu0 %v1119
    %1737 = vmatpush.bf16.msra.mxu0 %v1115
    %1738 = vmatmul.bf16.gmra.mxu0 %v330
    %v1739 = vpop.f32.mrf.mxu0
    %v1740 = vadd.f32 %v311, %v1739
    %v1741 = vpop.f32.mrf.mxu0
    %1742 = vdwg.mxu0
    %1743 = vmatpush.bf16.msra.mxu0 %v1175
    %1744 = vmatpush.bf16.msra.mxu0 %v1171
    %1745 = vmatpush.bf16.msra.mxu0 %v1167
    %1746 = vmatpush.bf16.msra.mxu0 %v1163
    %1747 = vmatpush.bf16.msra.mxu0 %v1159
    %1748 = vmatpush.bf16.msra.mxu0 %v1155
    %1749 = vmatpush.bf16.msra.mxu0 %v1151
    %1750 = vmatpush.bf16.msra.mxu0 %v1147
    %1751 = vmatmul.bf16.gmra.mxu0 %v331
    %v1752 = vpop.f32.mrf.mxu0
    %v1753 = vadd.f32 %v1740, %v1752
    %v1754 = vpop.f32.mrf.mxu0
    %1755 = vdwg.mxu0
    %1756 = vmatpush.bf16.msra.mxu0 %v1207
    %1757 = vmatpush.bf16.msra.mxu0 %v1203
    %1758 = vmatpush.bf16.msra.mxu0 %v1199
    %1759 = vmatpush.bf16.msra.mxu0 %v1195
    %1760 = vmatpush.bf16.msra.mxu0 %v1191
    %1761 = vmatpush.bf16.msra.mxu0 %v1187
    %1762 = vmatpush.bf16.msra.mxu0 %v1183
    %1763 = vmatpush.bf16.msra.mxu0 %v1179
    %1764 = vmatmul.bf16.gmra.mxu0 %v332
    %v1765 = vpop.f32.mrf.mxu0
    %v1766 = vadd.f32 %v1753, %v1765
    %v1767 = vpop.f32.mrf.mxu0
    %1768 = vdwg.mxu0
    %1769 = vmatpush.bf16.msra.mxu0 %v1239
    %1770 = vmatpush.bf16.msra.mxu0 %v1235
    %1771 = vmatpush.bf16.msra.mxu0 %v1231
    %1772 = vmatpush.bf16.msra.mxu0 %v1227
    %1773 = vmatpush.bf16.msra.mxu0 %v1223
    %1774 = vmatpush.bf16.msra.mxu0 %v1219
    %1775 = vmatpush.bf16.msra.mxu0 %v1215
    %1776 = vmatpush.bf16.msra.mxu0 %v1211
    %1777 = vmatmul.bf16.gmra.mxu0 %v333
    %v1778 = vpop.f32.mrf.mxu0
    %v1779 = vadd.f32 %v1766, %v1778
    %v1780 = vpop.f32.mrf.mxu0
    %1781 = vdwg.mxu0
    %1782 = vmatpush.bf16.msra.mxu0 %v1271
    %1783 = vmatpush.bf16.msra.mxu0 %v1267
    %1784 = vmatpush.bf16.msra.mxu0 %v1263
    %1785 = vmatpush.bf16.msra.mxu0 %v1259
    %1786 = vmatpush.bf16.msra.mxu0 %v1255
    %1787 = vmatpush.bf16.msra.mxu0 %v1251
    %1788 = vmatpush.bf16.msra.mxu0 %v1247
    %1789 = vmatpush.bf16.msra.mxu0 %v1243
    %1790 = vmatmul.bf16.gmra.mxu0 %v334
    %v1791 = vpop.f32.mrf.mxu0
    %v1792 = vadd.f32 %v1779, %v1791
    %v1793 = vpop.f32.mrf.mxu0
    %1794 = vdwg.mxu0
    %1795 = vmatpush.bf16.msra.mxu0 %v1303
    %1796 = vmatpush.bf16.msra.mxu0 %v1299
    %1797 = vmatpush.bf16.msra.mxu0 %v1295
    %1798 = vmatpush.bf16.msra.mxu0 %v1291
    %1799 = vmatpush.bf16.msra.mxu0 %v1287
    %1800 = vmatpush.bf16.msra.mxu0 %v1283
    %1801 = vmatpush.bf16.msra.mxu0 %v1279
    %1802 = vmatpush.bf16.msra.mxu0 %v1275
    %1803 = vmatmul.bf16.gmra.mxu0 %v335
    %v1804 = vpop.f32.mrf.mxu0
    %v1805 = vadd.f32 %v1792, %v1804
    %v1806 = vpop.f32.mrf.mxu0
    %1807 = vdwg.mxu0
    %1808 = vmatpush.bf16.msra.mxu0 %v1335
    %1809 = vmatpush.bf16.msra.mxu0 %v1331
    %1810 = vmatpush.bf16.msra.mxu0 %v1327
    %1811 = vmatpush.bf16.msra.mxu0 %v1323
    %1812 = vmatpush.bf16.msra.mxu0 %v1319
    %1813 = vmatpush.bf16.msra.mxu0 %v1315
    %1814 = vmatpush.bf16.msra.mxu0 %v1311
    %1815 = vmatpush.bf16.msra.mxu0 %v1307
    %1816 = vmatmul.bf16.gmra.mxu0 %v336
    %v1817 = vpop.f32.mrf.mxu0
    %v1818 = vadd.f32 %v1805, %v1817
    %v1819 = vpop.f32.mrf.mxu0
    %1820 = vdwg.mxu0
    %1821 = vmatpush.bf16.msra.mxu0 %v1367
    %1822 = vmatpush.bf16.msra.mxu0 %v1363
    %1823 = vmatpush.bf16.msra.mxu0 %v1359
    %1824 = vmatpush.bf16.msra.mxu0 %v1355
    %1825 = vmatpush.bf16.msra.mxu0 %v1351
    %1826 = vmatpush.bf16.msra.mxu0 %v1347
    %1827 = vmatpush.bf16.msra.mxu0 %v1343
    %1828 = vmatpush.bf16.msra.mxu0 %v1339
    %1829 = vmatmul.bf16.gmra.mxu0 %v337
    %v1830 = vpop.f32.mrf.mxu0
    %v1831 = vadd.f32 %v1818, %v1830
    %v1832 = vpop.f32.mrf.mxu0
    %1833 = vdwg.mxu0
    %1834 = vmatpush.bf16.msra.mxu0 %v1144
    %1835 = vmatpush.bf16.msra.mxu0 %v1140
    %1836 = vmatpush.bf16.msra.mxu0 %v1136
    %1837 = vmatpush.bf16.msra.mxu0 %v1132
    %1838 = vmatpush.bf16.msra.mxu0 %v1128
    %1839 = vmatpush.bf16.msra.mxu0 %v1124
    %1840 = vmatpush.bf16.msra.mxu0 %v1120
    %1841 = vmatpush.bf16.msra.mxu0 %v1116
    %1842 = vmatmul.bf16.gmra.mxu0 %v330
    %v1843 = vpop.f32.mrf.mxu0
    %v1844 = vadd.f32 %v312, %v1843
    %v1845 = vpop.f32.mrf.mxu0
    %1846 = vdwg.mxu0
    %1847 = vmatpush.bf16.msra.mxu0 %v1176
    %1848 = vmatpush.bf16.msra.mxu0 %v1172
    %1849 = vmatpush.bf16.msra.mxu0 %v1168
    %1850 = vmatpush.bf16.msra.mxu0 %v1164
    %1851 = vmatpush.bf16.msra.mxu0 %v1160
    %1852 = vmatpush.bf16.msra.mxu0 %v1156
    %1853 = vmatpush.bf16.msra.mxu0 %v1152
    %1854 = vmatpush.bf16.msra.mxu0 %v1148
    %1855 = vmatmul.bf16.gmra.mxu0 %v331
    %v1856 = vpop.f32.mrf.mxu0
    %v1857 = vadd.f32 %v1844, %v1856
    %v1858 = vpop.f32.mrf.mxu0
    %1859 = vdwg.mxu0
    %1860 = vmatpush.bf16.msra.mxu0 %v1208
    %1861 = vmatpush.bf16.msra.mxu0 %v1204
    %1862 = vmatpush.bf16.msra.mxu0 %v1200
    %1863 = vmatpush.bf16.msra.mxu0 %v1196
    %1864 = vmatpush.bf16.msra.mxu0 %v1192
    %1865 = vmatpush.bf16.msra.mxu0 %v1188
    %1866 = vmatpush.bf16.msra.mxu0 %v1184
    %1867 = vmatpush.bf16.msra.mxu0 %v1180
    %1868 = vmatmul.bf16.gmra.mxu0 %v332
    %v1869 = vpop.f32.mrf.mxu0
    %v1870 = vadd.f32 %v1857, %v1869
    %v1871 = vpop.f32.mrf.mxu0
    %1872 = vdwg.mxu0
    %1873 = vmatpush.bf16.msra.mxu0 %v1240
    %1874 = vmatpush.bf16.msra.mxu0 %v1236
    %1875 = vmatpush.bf16.msra.mxu0 %v1232
    %1876 = vmatpush.bf16.msra.mxu0 %v1228
    %1877 = vmatpush.bf16.msra.mxu0 %v1224
    %1878 = vmatpush.bf16.msra.mxu0 %v1220
    %1879 = vmatpush.bf16.msra.mxu0 %v1216
    %1880 = vmatpush.bf16.msra.mxu0 %v1212
    %1881 = vmatmul.bf16.gmra.mxu0 %v333
    %v1882 = vpop.f32.mrf.mxu0
    %v1883 = vadd.f32 %v1870, %v1882
    %v1884 = vpop.f32.mrf.mxu0
    %1885 = vdwg.mxu0
    %1886 = vmatpush.bf16.msra.mxu0 %v1272
    %1887 = vmatpush.bf16.msra.mxu0 %v1268
    %1888 = vmatpush.bf16.msra.mxu0 %v1264
    %1889 = vmatpush.bf16.msra.mxu0 %v1260
    %1890 = vmatpush.bf16.msra.mxu0 %v1256
    %1891 = vmatpush.bf16.msra.mxu0 %v1252
    %1892 = vmatpush.bf16.msra.mxu0 %v1248
    %1893 = vmatpush.bf16.msra.mxu0 %v1244
    %1894 = vmatmul.bf16.gmra.mxu0 %v334
    %v1895 = vpop.f32.mrf.mxu0
    %v1896 = vadd.f32 %v1883, %v1895
    %v1897 = vpop.f32.mrf.mxu0
    %1898 = vdwg.mxu0
    %1899 = vmatpush.bf16.msra.mxu0 %v1304
    %1900 = vmatpush.bf16.msra.mxu0 %v1300
    %1901 = vmatpush.bf16.msra.mxu0 %v1296
    %1902 = vmatpush.bf16.msra.mxu0 %v1292
    %1903 = vmatpush.bf16.msra.mxu0 %v1288
    %1904 = vmatpush.bf16.msra.mxu0 %v1284
    %1905 = vmatpush.bf16.msra.mxu0 %v1280
    %1906 = vmatpush.bf16.msra.mxu0 %v1276
    %1907 = vmatmul.bf16.gmra.mxu0 %v335
    %v1908 = vpop.f32.mrf.mxu0
    %v1909 = vadd.f32 %v1896, %v1908
    %v1910 = vpop.f32.mrf.mxu0
    %1911 = vdwg.mxu0
    %1912 = vmatpush.bf16.msra.mxu0 %v1336
    %1913 = vmatpush.bf16.msra.mxu0 %v1332
    %1914 = vmatpush.bf16.msra.mxu0 %v1328
    %1915 = vmatpush.bf16.msra.mxu0 %v1324
    %1916 = vmatpush.bf16.msra.mxu0 %v1320
    %1917 = vmatpush.bf16.msra.mxu0 %v1316
    %1918 = vmatpush.bf16.msra.mxu0 %v1312
    %1919 = vmatpush.bf16.msra.mxu0 %v1308
    %1920 = vmatmul.bf16.gmra.mxu0 %v336
    %v1921 = vpop.f32.mrf.mxu0
    %v1922 = vadd.f32 %v1909, %v1921
    %v1923 = vpop.f32.mrf.mxu0
    %1924 = vdwg.mxu0
    %1925 = vmatpush.bf16.msra.mxu0 %v1368
    %1926 = vmatpush.bf16.msra.mxu0 %v1364
    %1927 = vmatpush.bf16.msra.mxu0 %v1360
    %1928 = vmatpush.bf16.msra.mxu0 %v1356
    %1929 = vmatpush.bf16.msra.mxu0 %v1352
    %1930 = vmatpush.bf16.msra.mxu0 %v1348
    %1931 = vmatpush.bf16.msra.mxu0 %v1344
    %1932 = vmatpush.bf16.msra.mxu0 %v1340
    %1933 = vmatmul.bf16.gmra.mxu0 %v337
    %v1934 = vpop.f32.mrf.mxu0
    %v1935 = vadd.f32 %v1922, %v1934
    %v1936 = vpop.f32.mrf.mxu0
    %1937 = vdwg.mxu0
    %1938 = vmatpush.bf16.msra.mxu0 %v1145
    %1939 = vmatpush.bf16.msra.mxu0 %v1141
    %1940 = vmatpush.bf16.msra.mxu0 %v1137
    %1941 = vmatpush.bf16.msra.mxu0 %v1133
    %1942 = vmatpush.bf16.msra.mxu0 %v1129
    %1943 = vmatpush.bf16.msra.mxu0 %v1125
    %1944 = vmatpush.bf16.msra.mxu0 %v1121
    %1945 = vmatpush.bf16.msra.mxu0 %v1117
    %1946 = vmatmul.bf16.gmra.mxu0 %v330
    %v1947 = vpop.f32.mrf.mxu0
    %v1948 = vadd.f32 %v313, %v1947
    %v1949 = vpop.f32.mrf.mxu0
    %1950 = vdwg.mxu0
    %1951 = vmatpush.bf16.msra.mxu0 %v1177
    %1952 = vmatpush.bf16.msra.mxu0 %v1173
    %1953 = vmatpush.bf16.msra.mxu0 %v1169
    %1954 = vmatpush.bf16.msra.mxu0 %v1165
    %1955 = vmatpush.bf16.msra.mxu0 %v1161
    %1956 = vmatpush.bf16.msra.mxu0 %v1157
    %1957 = vmatpush.bf16.msra.mxu0 %v1153
    %1958 = vmatpush.bf16.msra.mxu0 %v1149
    %1959 = vmatmul.bf16.gmra.mxu0 %v331
    %v1960 = vpop.f32.mrf.mxu0
    %v1961 = vadd.f32 %v1948, %v1960
    %v1962 = vpop.f32.mrf.mxu0
    %1963 = vdwg.mxu0
    %1964 = vmatpush.bf16.msra.mxu0 %v1209
    %1965 = vmatpush.bf16.msra.mxu0 %v1205
    %1966 = vmatpush.bf16.msra.mxu0 %v1201
    %1967 = vmatpush.bf16.msra.mxu0 %v1197
    %1968 = vmatpush.bf16.msra.mxu0 %v1193
    %1969 = vmatpush.bf16.msra.mxu0 %v1189
    %1970 = vmatpush.bf16.msra.mxu0 %v1185
    %1971 = vmatpush.bf16.msra.mxu0 %v1181
    %1972 = vmatmul.bf16.gmra.mxu0 %v332
    %v1973 = vpop.f32.mrf.mxu0
    %v1974 = vadd.f32 %v1961, %v1973
    %v1975 = vpop.f32.mrf.mxu0
    %1976 = vdwg.mxu0
    %1977 = vmatpush.bf16.msra.mxu0 %v1241
    %1978 = vmatpush.bf16.msra.mxu0 %v1237
    %1979 = vmatpush.bf16.msra.mxu0 %v1233
    %1980 = vmatpush.bf16.msra.mxu0 %v1229
    %1981 = vmatpush.bf16.msra.mxu0 %v1225
    %1982 = vmatpush.bf16.msra.mxu0 %v1221
    %1983 = vmatpush.bf16.msra.mxu0 %v1217
    %1984 = vmatpush.bf16.msra.mxu0 %v1213
    %1985 = vmatmul.bf16.gmra.mxu0 %v333
    %v1986 = vpop.f32.mrf.mxu0
    %v1987 = vadd.f32 %v1974, %v1986
    %v1988 = vpop.f32.mrf.mxu0
    %1989 = vdwg.mxu0
    %1990 = vmatpush.bf16.msra.mxu0 %v1273
    %1991 = vmatpush.bf16.msra.mxu0 %v1269
    %1992 = vmatpush.bf16.msra.mxu0 %v1265
    %1993 = vmatpush.bf16.msra.mxu0 %v1261
    %1994 = vmatpush.bf16.msra.mxu0 %v1257
    %1995 = vmatpush.bf16.msra.mxu0 %v1253
    %1996 = vmatpush.bf16.msra.mxu0 %v1249
    %1997 = vmatpush.bf16.msra.mxu0 %v1245
    %1998 = vmatmul.bf16.gmra.mxu0 %v334
    %v1999 = vpop.f32.mrf.mxu0
    %v2000 = vadd.f32 %v1987, %v1999
    %v2001 = vpop.f32.mrf.mxu0
    %2002 = vdwg.mxu0
    %2003 = vmatpush.bf16.msra.mxu0 %v1305
    %2004 = vmatpush.bf16.msra.mxu0 %v1301
    %2005 = vmatpush.bf16.msra.mxu0 %v1297
    %2006 = vmatpush.bf16.msra.mxu0 %v1293
    %2007 = vmatpush.bf16.msra.mxu0 %v1289
    %2008 = vmatpush.bf16.msra.mxu0 %v1285
    %2009 = vmatpush.bf16.msra.mxu0 %v1281
    %2010 = vmatpush.bf16.msra.mxu0 %v1277
    %2011 = vmatmul.bf16.gmra.mxu0 %v335
    %v2012 = vpop.f32.mrf.mxu0
    %v2013 = vadd.f32 %v2000, %v2012
    %v2014 = vpop.f32.mrf.mxu0
    %2015 = vdwg.mxu0
    %2016 = vmatpush.bf16.msra.mxu0 %v1337
    %2017 = vmatpush.bf16.msra.mxu0 %v1333
    %2018 = vmatpush.bf16.msra.mxu0 %v1329
    %2019 = vmatpush.bf16.msra.mxu0 %v1325
    %2020 = vmatpush.bf16.msra.mxu0 %v1321
    %2021 = vmatpush.bf16.msra.mxu0 %v1317
    %2022 = vmatpush.bf16.msra.mxu0 %v1313
    %2023 = vmatpush.bf16.msra.mxu0 %v1309
    %2024 = vmatmul.bf16.gmra.mxu0 %v336
    %v2025 = vpop.f32.mrf.mxu0
    %v2026 = vadd.f32 %v2013, %v2025
    %v2027 = vpop.f32.mrf.mxu0
    %2028 = vdwg.mxu0
    %2029 = vmatpush.bf16.msra.mxu0 %v1369
    %2030 = vmatpush.bf16.msra.mxu0 %v1365
    %2031 = vmatpush.bf16.msra.mxu0 %v1361
    %2032 = vmatpush.bf16.msra.mxu0 %v1357
    %2033 = vmatpush.bf16.msra.mxu0 %v1353
    %2034 = vmatpush.bf16.msra.mxu0 %v1349
    %2035 = vmatpush.bf16.msra.mxu0 %v1345
    %2036 = vmatpush.bf16.msra.mxu0 %v1341
    %2037 = vmatmul.bf16.gmra.mxu0 %v337
    %v2038 = vpop.f32.mrf.mxu0
    %v2039 = vadd.f32 %v2026, %v2038
    %v2040 = vpop.f32.mrf.mxu0
    %2041 = vdwg.mxu0
    %v2042 = vmax.f32 %v1727, 0.0
    %v2043 = vmax.f32 %v1831, 0.0
    %v2044 = vmax.f32 %v1935, 0.0
    %v2045 = vmax.f32 %v2039, 0.0
    %v2046 = vpack.c.bf16 %v2042, %v2042
    %v2047 = vpack.c.bf16 %v2043, %v2043
    %v2048 = vpack.c.bf16 %v2044, %v2044
    %v2049 = vpack.c.bf16 %v2045, %v2045
    %v2050 = vld [vmem:[%s4] sm:$0xf]
    %v2051 = vld [vmem:[%s4 + $0x4] sm:$0xf]
    %v2052 = vld [vmem:[%s4 + $0x8] sm:$0xf]
    %v2053 = vld [vmem:[%s4 + $0xc] sm:$0xf]
    %v2054 = vld [vmem:[%s4 + $0x10] sm:$0xf]
    %v2055 = vld [vmem:[%s4 + $0x14] sm:$0xf]
    %v2056 = vld [vmem:[%s4 + $0x18] sm:$0xf]
    %v2057 = vld [vmem:[%s4 + $0x1c] sm:$0xf]
    %v2058 = vld [vmem:[%s4 + $0x20] sm:$0xf]
    %v2059 = vld [vmem:[%s4 + $0x24] sm:$0xf]
    %v2060 = vld [vmem:[%s4 + $0x28] sm:$0xf]
    %v2061 = vld [vmem:[%s4 + $0x2c] sm:$0xf]
    %v2062 = vld [vmem:[%s4 + $0x30] sm:$0xf]
    %v2063 = vld [vmem:[%s4 + $0x34] sm:$0xf]
    %v2064 = vld [vmem:[%s4 + $0x38] sm:$0xf]
    %v2065 = vld [vmem:[%s4 + $0x3c] sm:$0xf]
    %v2066 = vld [vmem:[%s4 + $0x40] sm:$0xf]
    %v2067 = vld [vmem:[%s4 + $0x44] sm:$0xf]
    %v2068 = vld [vmem:[%s4 + $0x48] sm:$0xf]
    %v2069 = vld [vmem:[%s4 + $0x4c] sm:$0xf]
    %v2070 = vld [vmem:[%s4 + $0x50] sm:$0xf]
    %v2071 = vld [vmem:[%s4 + $0x54] sm:$0xf]
    %v2072 = vld [vmem:[%s4 + $0x58] sm:$0xf]
    %v2073 = vld [vmem:[%s4 + $0x5c] sm:$0xf]
    %v2074 = vld [vmem:[%s4 + $0x60] sm:$0xf]
    %v2075 = vld [vmem:[%s4 + $0x64] sm:$0xf]
    %v2076 = vld [vmem:[%s4 + $0x68] sm:$0xf]
    %v2077 = vld [vmem:[%s4 + $0x6c] sm:$0xf]
    %v2078 = vld [vmem:[%s4 + $0x70] sm:$0xf]
    %v2079 = vld [vmem:[%s4 + $0x74] sm:$0xf]
    %v2080 = vld [vmem:[%s4 + $0x78] sm:$0xf]
    %v2081 = vld [vmem:[%s4 + $0x7c] sm:$0xf]
    %v2082 = vld [vmem:[%s4 + $0x80] sm:$0xf]
    %v2083 = vld [vmem:[%s4 + $0x84] sm:$0xf]
    %v2084 = vld [vmem:[%s4 + $0x88] sm:$0xf]
    %v2085 = vld [vmem:[%s4 + $0x8c] sm:$0xf]
    %v2086 = vld [vmem:[%s4 + $0x90] sm:$0xf]
    %v2087 = vld [vmem:[%s4 + $0x94] sm:$0xf]
    %v2088 = vld [vmem:[%s4 + $0x98] sm:$0xf]
    %v2089 = vld [vmem:[%s4 + $0x9c] sm:$0xf]
    %v2090 = vld [vmem:[%s4 + $0xa0] sm:$0xf]
    %v2091 = vld [vmem:[%s4 + $0xa4] sm:$0xf]
    %v2092 = vld [vmem:[%s4 + $0xa8] sm:$0xf]
    %v2093 = vld [vmem:[%s4 + $0xac] sm:$0xf]
    %v2094 = vld [vmem:[%s4 + $0xb0] sm:$0xf]
    %v2095 = vld [vmem:[%s4 + $0xb4] sm:$0xf]
    %v2096 = vld [vmem:[%s4 + $0xb8] sm:$0xf]
    %v2097 = vld [vmem:[%s4 + $0xbc] sm:$0xf]
    %v2098 = vld [vmem:[%s4 + $0xc0] sm:$0xf]
    %v2099 = vld [vmem:[%s4 + $0xc4] sm:$0xf]
    %v2100 = vld [vmem:[%s4 + $0xc8] sm:$0xf]
    %v2101 = vld [vmem:[%s4 + $0xcc] sm:$0xf]
    %v2102 = vld [vmem:[%s4 + $0xd0] sm:$0xf]
    %v2103 = vld [vmem:[%s4 + $0xd4] sm:$0xf]
    %v2104 = vld [vmem:[%s4 + $0xd8] sm:$0xf]
    %v2105 = vld [vmem:[%s4 + $0xdc] sm:$0xf]
    %v2106 = vld [vmem:[%s4 + $0xe0] sm:$0xf]
    %v2107 = vld [vmem:[%s4 + $0xe4] sm:$0xf]
    %v2108 = vld [vmem:[%s4 + $0xe8] sm:$0xf]
    %v2109 = vld [vmem:[%s4 + $0xec] sm:$0xf]
    %v2110 = vld [vmem:[%s4 + $0xf0] sm:$0xf]
    %v2111 = vld [vmem:[%s4 + $0xf4] sm:$0xf]
    %v2112 = vld [vmem:[%s4 + $0xf8] sm:$0xf]
    %v2113 = vld [vmem:[%s4 + $0xfc] sm:$0xf]
    %v2114 = vld [vmem:[%s5] sm:$0x1]
    %v2116 = vperm.slane %v2114, 0
    %v2182 = vunpack.c.l.b16 %v2050
    %v2183 = vunpack.c.l.b16 %v2051
    %v2184 = vunpack.c.l.b16 %v2052
    %v2185 = vunpack.c.l.b16 %v2053
    %v2186 = vunpack.c.l.b16 %v2054
    %v2187 = vunpack.c.l.b16 %v2055
    %v2188 = vunpack.c.l.b16 %v2056
    %v2189 = vunpack.c.l.b16 %v2057
    %v2190 = vunpack.c.l.b16 %v2058
    %v2191 = vunpack.c.l.b16 %v2059
    %v2192 = vunpack.c.l.b16 %v2060
    %v2193 = vunpack.c.l.b16 %v2061
    %v2194 = vunpack.c.l.b16 %v2062
    %v2195 = vunpack.c.l.b16 %v2063
    %v2196 = vunpack.c.l.b16 %v2064
    %v2197 = vunpack.c.l.b16 %v2065
    %v2198 = vunpack.c.l.b16 %v2066
    %v2199 = vunpack.c.l.b16 %v2067
    %v2200 = vunpack.c.l.b16 %v2068
    %v2201 = vunpack.c.l.b16 %v2069
    %v2202 = vunpack.c.l.b16 %v2070
    %v2203 = vunpack.c.l.b16 %v2071
    %v2204 = vunpack.c.l.b16 %v2072
    %v2205 = vunpack.c.l.b16 %v2073
    %v2206 = vunpack.c.l.b16 %v2074
    %v2207 = vunpack.c.l.b16 %v2075
    %v2208 = vunpack.c.l.b16 %v2076
    %v2209 = vunpack.c.l.b16 %v2077
    %v2210 = vunpack.c.l.b16 %v2078
    %v2211 = vunpack.c.l.b16 %v2079
    %v2212 = vunpack.c.l.b16 %v2080
    %v2213 = vunpack.c.l.b16 %v2081
    %v2214 = vunpack.c.l.b16 %v2082
    %v2215 = vunpack.c.l.b16 %v2083
    %v2216 = vunpack.c.l.b16 %v2084
    %v2217 = vunpack.c.l.b16 %v2085
    %v2218 = vunpack.c.l.b16 %v2086
    %v2219 = vunpack.c.l.b16 %v2087
    %v2220 = vunpack.c.l.b16 %v2088
    %v2221 = vunpack.c.l.b16 %v2089
    %v2222 = vunpack.c.l.b16 %v2090
    %v2223 = vunpack.c.l.b16 %v2091
    %v2224 = vunpack.c.l.b16 %v2092
    %v2225 = vunpack.c.l.b16 %v2093
    %v2226 = vunpack.c.l.b16 %v2094
    %v2227 = vunpack.c.l.b16 %v2095
    %v2228 = vunpack.c.l.b16 %v2096
    %v2229 = vunpack.c.l.b16 %v2097
    %v2230 = vunpack.c.l.b16 %v2098
    %v2231 = vunpack.c.l.b16 %v2099
    %v2232 = vunpack.c.l.b16 %v2100
    %v2233 = vunpack.c.l.b16 %v2101
    %v2234 = vunpack.c.l.b16 %v2102
    %v2235 = vunpack.c.l.b16 %v2103
    %v2236 = vunpack.c.l.b16 %v2104
    %v2237 = vunpack.c.l.b16 %v2105
    %v2238 = vunpack.c.l.b16 %v2106
    %v2239 = vunpack.c.l.b16 %v2107
    %v2240 = vunpack.c.l.b16 %v2108
    %v2241 = vunpack.c.l.b16 %v2109
    %v2242 = vunpack.c.l.b16 %v2110
    %v2243 = vunpack.c.l.b16 %v2111
    %v2244 = vunpack.c.l.b16 %v2112
    %v2245 = vunpack.c.l.b16 %v2113
    %v2246 = vpack.c.b16 %v2183, %v2182
    %v2247 = vpack.c.b16 %v2185, %v2184
    %v2248 = vpack.c.b16 %v2187, %v2186
    %v2249 = vpack.c.b16 %v2189, %v2188
    %v2250 = vpack.c.b16 %v2191, %v2190
    %v2251 = vpack.c.b16 %v2193, %v2192
    %v2252 = vpack.c.b16 %v2195, %v2194
    %v2253 = vpack.c.b16 %v2197, %v2196
    %v2254 = vpack.c.b16 %v2199, %v2198
    %v2255 = vpack.c.b16 %v2201, %v2200
    %v2256 = vpack.c.b16 %v2203, %v2202
    %v2257 = vpack.c.b16 %v2205, %v2204
    %v2258 = vpack.c.b16 %v2207, %v2206
    %v2259 = vpack.c.b16 %v2209, %v2208
    %v2260 = vpack.c.b16 %v2211, %v2210
    %v2261 = vpack.c.b16 %v2213, %v2212
    %v2262 = vpack.c.b16 %v2215, %v2214
    %v2263 = vpack.c.b16 %v2217, %v2216
    %v2264 = vpack.c.b16 %v2219, %v2218
    %v2265 = vpack.c.b16 %v2221, %v2220
    %v2266 = vpack.c.b16 %v2223, %v2222
    %v2267 = vpack.c.b16 %v2225, %v2224
    %v2268 = vpack.c.b16 %v2227, %v2226
    %v2269 = vpack.c.b16 %v2229, %v2228
    %v2270 = vpack.c.b16 %v2231, %v2230
    %v2271 = vpack.c.b16 %v2233, %v2232
    %v2272 = vpack.c.b16 %v2235, %v2234
    %v2273 = vpack.c.b16 %v2237, %v2236
    %v2274 = vpack.c.b16 %v2239, %v2238
    %v2275 = vpack.c.b16 %v2241, %v2240
    %v2276 = vpack.c.b16 %v2243, %v2242
    %v2277 = vpack.c.b16 %v2245, %v2244
    %2310 = vmatpush.bf16.msra.mxu0 %v2253
    %2311 = vmatpush.bf16.msra.mxu0 %v2252
    %2312 = vmatpush.bf16.msra.mxu0 %v2251
    %2313 = vmatpush.bf16.msra.mxu0 %v2250
    %2314 = vmatpush.bf16.msra.mxu0 %v2249
    %2315 = vmatpush.bf16.msra.mxu0 %v2248
    %2316 = vmatpush.bf16.msra.mxu0 %v2247
    %2317 = vmatpush.bf16.msra.mxu0 %v2246
    %2318 = vmatmul.bf16.gmra.mxu0 %v2046
    %v2319 = vpop.f32.mrf.mxu0
    %v2320 = vadd.f32 %v2116, %v2319
    %v2321 = vpop.f32.mrf.mxu0
    %2322 = vdwg.mxu0
    %2323 = vmatpush.bf16.msra.mxu0 %v2261
    %2324 = vmatpush.bf16.msra.mxu0 %v2260
    %2325 = vmatpush.bf16.msra.mxu0 %v2259
    %2326 = vmatpush.bf16.msra.mxu0 %v2258
    %2327 = vmatpush.bf16.msra.mxu0 %v2257
    %2328 = vmatpush.bf16.msra.mxu0 %v2256
    %2329 = vmatpush.bf16.msra.mxu0 %v2255
    %2330 = vmatpush.bf16.msra.mxu0 %v2254
    %2331 = vmatmul.bf16.gmra.mxu0 %v2047
    %v2332 = vpop.f32.mrf.mxu0
    %v2333 = vadd.f32 %v2320, %v2332
    %v2334 = vpop.f32.mrf.mxu0
    %2335 = vdwg.mxu0
    %2336 = vmatpush.bf16.msra.mxu0 %v2269
    %2337 = vmatpush.bf16.msra.mxu0 %v2268
    %2338 = vmatpush.bf16.msra.mxu0 %v2267
    %2339 = vmatpush.bf16.msra.mxu0 %v2266
    %2340 = vmatpush.bf16.msra.mxu0 %v2265
    %2341 = vmatpush.bf16.msra.mxu0 %v2264
    %2342 = vmatpush.bf16.msra.mxu0 %v2263
    %2343 = vmatpush.bf16.msra.mxu0 %v2262
    %2344 = vmatmul.bf16.gmra.mxu0 %v2048
    %v2345 = vpop.f32.mrf.mxu0
    %v2346 = vadd.f32 %v2333, %v2345
    %v2347 = vpop.f32.mrf.mxu0
    %2348 = vdwg.mxu0
    %2349 = vmatpush.bf16.msra.mxu0 %v2277
    %2350 = vmatpush.bf16.msra.mxu0 %v2276
    %2351 = vmatpush.bf16.msra.mxu0 %v2275
    %2352 = vmatpush.bf16.msra.mxu0 %v2274
    %2353 = vmatpush.bf16.msra.mxu0 %v2273
    %2354 = vmatpush.bf16.msra.mxu0 %v2272
    %2355 = vmatpush.bf16.msra.mxu0 %v2271
    %2356 = vmatpush.bf16.msra.mxu0 %v2270
    %2357 = vmatmul.bf16.gmra.mxu0 %v2049
    %v2358 = vpop.f32.mrf.mxu0
    %v2359 = vadd.f32 %v2346, %v2358
    %v2360 = vpop.f32.mrf.mxu0
    %2361 = vdwg.mxu0
    %v2362 = vmul.f32 %v2359, 0.5
    %v2363 = vmul.f32 %v2362, 1.442695
    %v2364 = vpow.pop %v2363
    %v2365 = vld [vmem:[%s1] sm:$0xff]
    %2367 = vrot.lane.b32.xlu0 %v2365, 16
    %v2368 = vpop.permute.xlu0 %2367
    %v2370 = vmul.f32 %v2364, %v2368
    %2372 = vrot.lane.b32.xlu0 %v2370, 112
    %v2373 = vpop.permute.xlu0 %2372
    %v2375 = vadd.f32 %v2359, %v2373
    %v2376 = vpack.c.bf16 %v2375, %v2375
    %v2377 = vld [vmem:[%s6] sm:$0xff]
    %v2378 = vld [vmem:[%s6 + $0x8] sm:$0xff]
    %v2379 = vld [vmem:[%s6 + $0x10] sm:$0xff]
    %v2380 = vld [vmem:[%s6 + $0x18] sm:$0xff]
    %v2381 = vld [vmem:[%s6 + $0x20] sm:$0xff]
    %v2382 = vld [vmem:[%s6 + $0x28] sm:$0xff]
    %v2383 = vld [vmem:[%s6 + $0x30] sm:$0xff]
    %v2384 = vld [vmem:[%s6 + $0x38] sm:$0xff]
    %v2385 = vld [vmem:[%s7] sm:$0xff]
    %v2387 = vperm.slane %v2385, 0
    %v2388 = vperm.slane %v2385, 1
    %v2389 = vperm.slane %v2385, 2
    %v2390 = vperm.slane %v2385, 3
    %v2391 = vperm.slane %v2385, 4
    %v2392 = vperm.slane %v2385, 5
    %v2393 = vperm.slane %v2385, 6
    %v2394 = vperm.slane %v2385, 7
    %v2411 = vunpack.c.l.b16 %v2377
    %v2412 = vunpack.c.h.b16 %v2377
    %v2413 = vunpack.c.l.b16 %v2378
    %v2414 = vunpack.c.h.b16 %v2378
    %v2415 = vunpack.c.l.b16 %v2379
    %v2416 = vunpack.c.h.b16 %v2379
    %v2417 = vunpack.c.l.b16 %v2380
    %v2418 = vunpack.c.h.b16 %v2380
    %v2419 = vunpack.c.l.b16 %v2381
    %v2420 = vunpack.c.h.b16 %v2381
    %v2421 = vunpack.c.l.b16 %v2382
    %v2422 = vunpack.c.h.b16 %v2382
    %v2423 = vunpack.c.l.b16 %v2383
    %v2424 = vunpack.c.h.b16 %v2383
    %v2425 = vunpack.c.l.b16 %v2384
    %v2426 = vunpack.c.h.b16 %v2384
    %v2427 = vpack.c.b16 %v2419, %v2411
    %v2428 = vpack.c.b16 %v2420, %v2412
    %v2429 = vpack.c.b16 %v2421, %v2413
    %v2430 = vpack.c.b16 %v2422, %v2414
    %v2431 = vpack.c.b16 %v2423, %v2415
    %v2432 = vpack.c.b16 %v2424, %v2416
    %v2433 = vpack.c.b16 %v2425, %v2417
    %v2434 = vpack.c.b16 %v2426, %v2418
    %vm2443 = vcmask 130048
    %v2445 = vsel %vm2443, %v2376, 0
    %2447 = vmatpush.bf16.msra.mxu0 0
    %2448 = vmatpush.bf16.msra.mxu0 0
    %2449 = vmatpush.bf16.msra.mxu0 0
    %2450 = vmatpush.bf16.msra.mxu0 0
    %2451 = vmatpush.bf16.msra.mxu0 0
    %2452 = vmatpush.bf16.msra.mxu0 0
    %2453 = vmatpush.bf16.msra.mxu0 0
    %2454 = vmatpush.bf16.msra.mxu0 %v2427
    %2455 = vmatmul.bf16.gmra.mxu0 %v2445
    %v2456 = vpop.f32.mrf.mxu0
    %v2457 = vadd.f32 %v2387, %v2456
    %v2458 = vpop.f32.mrf.mxu0
    %2459 = vdwg.mxu0
    %2460 = vmatpush.bf16.msra.mxu0 0
    %2461 = vmatpush.bf16.msra.mxu0 0
    %2462 = vmatpush.bf16.msra.mxu0 0
    %2463 = vmatpush.bf16.msra.mxu0 0
    %2464 = vmatpush.bf16.msra.mxu0 0
    %2465 = vmatpush.bf16.msra.mxu0 0
    %2466 = vmatpush.bf16.msra.mxu0 0
    %2467 = vmatpush.bf16.msra.mxu0 %v2428
    %2468 = vmatmul.bf16.gmra.mxu0 %v2445
    %v2469 = vpop.f32.mrf.mxu0
    %v2470 = vadd.f32 %v2388, %v2469
    %v2471 = vpop.f32.mrf.mxu0
    %2472 = vdwg.mxu0
    %2473 = vmatpush.bf16.msra.mxu0 0
    %2474 = vmatpush.bf16.msra.mxu0 0
    %2475 = vmatpush.bf16.msra.mxu0 0
    %2476 = vmatpush.bf16.msra.mxu0 0
    %2477 = vmatpush.bf16.msra.mxu0 0
    %2478 = vmatpush.bf16.msra.mxu0 0
    %2479 = vmatpush.bf16.msra.mxu0 0
    %2480 = vmatpush.bf16.msra.mxu0 %v2429
    %2481 = vmatmul.bf16.gmra.mxu0 %v2445
    %v2482 = vpop.f32.mrf.mxu0
    %v2483 = vadd.f32 %v2389, %v2482
    %v2484 = vpop.f32.mrf.mxu0
    %2485 = vdwg.mxu0
    %2486 = vmatpush.bf16.msra.mxu0 0
    %2487 = vmatpush.bf16.msra.mxu0 0
    %2488 = vmatpush.bf16.msra.mxu0 0
    %2489 = vmatpush.bf16.msra.mxu0 0
    %2490 = vmatpush.bf16.msra.mxu0 0
    %2491 = vmatpush.bf16.msra.mxu0 0
    %2492 = vmatpush.bf16.msra.mxu0 0
    %2493 = vmatpush.bf16.msra.mxu0 %v2430
    %2494 = vmatmul.bf16.gmra.mxu0 %v2445
    %v2495 = vpop.f32.mrf.mxu0
    %v2496 = vadd.f32 %v2390, %v2495
    %v2497 = vpop.f32.mrf.mxu0
    %2498 = vdwg.mxu0
    %2499 = vmatpush.bf16.msra.mxu0 0
    %2500 = vmatpush.bf16.msra.mxu0 0
    %2501 = vmatpush.bf16.msra.mxu0 0
    %2502 = vmatpush.bf16.msra.mxu0 0
    %2503 = vmatpush.bf16.msra.mxu0 0
    %2504 = vmatpush.bf16.msra.mxu0 0
    %2505 = vmatpush.bf16.msra.mxu0 0
    %2506 = vmatpush.bf16.msra.mxu0 %v2431
    %2507 = vmatmul.bf16.gmra.mxu0 %v2445
    %v2508 = vpop.f32.mrf.mxu0
    %v2509 = vadd.f32 %v2391, %v2508
    %v2510 = vpop.f32.mrf.mxu0
    %2511 = vdwg.mxu0
    %2512 = vmatpush.bf16.msra.mxu0 0
    %2513 = vmatpush.bf16.msra.mxu0 0
    %2514 = vmatpush.bf16.msra.mxu0 0
    %2515 = vmatpush.bf16.msra.mxu0 0
    %2516 = vmatpush.bf16.msra.mxu0 0
    %2517 = vmatpush.bf16.msra.mxu0 0
    %2518 = vmatpush.bf16.msra.mxu0 0
    %2519 = vmatpush.bf16.msra.mxu0 %v2432
    %2520 = vmatmul.bf16.gmra.mxu0 %v2445
    %v2521 = vpop.f32.mrf.mxu0
    %v2522 = vadd.f32 %v2392, %v2521
    %v2523 = vpop.f32.mrf.mxu0
    %2524 = vdwg.mxu0
    %2525 = vmatpush.bf16.msra.mxu0 0
    %2526 = vmatpush.bf16.msra.mxu0 0
    %2527 = vmatpush.bf16.msra.mxu0 0
    %2528 = vmatpush.bf16.msra.mxu0 0
    %2529 = vmatpush.bf16.msra.mxu0 0
    %2530 = vmatpush.bf16.msra.mxu0 0
    %2531 = vmatpush.bf16.msra.mxu0 0
    %2532 = vmatpush.bf16.msra.mxu0 %v2433
    %2533 = vmatmul.bf16.gmra.mxu0 %v2445
    %v2534 = vpop.f32.mrf.mxu0
    %v2535 = vadd.f32 %v2393, %v2534
    %v2536 = vpop.f32.mrf.mxu0
    %2537 = vdwg.mxu0
    %2538 = vmatpush.bf16.msra.mxu0 0
    %2539 = vmatpush.bf16.msra.mxu0 0
    %2540 = vmatpush.bf16.msra.mxu0 0
    %2541 = vmatpush.bf16.msra.mxu0 0
    %2542 = vmatpush.bf16.msra.mxu0 0
    %2543 = vmatpush.bf16.msra.mxu0 0
    %2544 = vmatpush.bf16.msra.mxu0 0
    %2545 = vmatpush.bf16.msra.mxu0 %v2434
    %2546 = vmatmul.bf16.gmra.mxu0 %v2445
    %v2547 = vpop.f32.mrf.mxu0
    %v2548 = vadd.f32 %v2394, %v2547
    %v2549 = vpop.f32.mrf.mxu0
    %2550 = vdwg.mxu0
    %v2551 = vtanh.pop %v2457
    %v2552 = vtanh.pop %v2470
    %v2553 = vtanh.pop %v2483
    %v2554 = vtanh.pop %v2496
    %v2555 = vtanh.pop %v2509
    %v2556 = vtanh.pop %v2522
    %v2557 = vtanh.pop %v2535
    %v2558 = vtanh.pop %v2548
    %2559 = vst [vmem:[%s8] sm:$0xff] %v2551
    %2560 = vst [vmem:[%s8 + $0x8] sm:$0xff] %v2552
    %2561 = vst [vmem:[%s8 + $0x10] sm:$0xff] %v2553
    %2562 = vst [vmem:[%s8 + $0x18] sm:$0xff] %v2554
    %2563 = vst [vmem:[%s8 + $0x20] sm:$0xff] %v2555
    %2564 = vst [vmem:[%s8 + $0x28] sm:$0xff] %v2556
    %2565 = vst [vmem:[%s8 + $0x30] sm:$0xff] %v2557
    %2566 = vst [vmem:[%s8 + $0x38] sm:$0xff] %v2558
    %vm2567 = vcmask 261120
    %2568 = vst.msk [vmem:[%s9] sm:$0xff] %vm2567, %v2359
    // Predicated region
    $region38: #{vae_forward.1} parent=1 // pred_check
      _
    $region39: #{vae_forward.1} parent=1 // pred_check_branch
      %2570 = sbr.rel (0) target = $region41
    $region40: #{vae_forward.1} parent=1 // pred_region
      _
    $region41: #{vae_forward.1} parent=1 // pred_fallthru
      _
    // Predicated region
    $region42: #{vae_forward.1} parent=1 // pred_check
      _
    $region43: #{vae_forward.1} parent=1 // pred_check_branch
      %2572 = sbr.rel (0) target = $region45
    $region44: #{vae_forward.1} parent=1 // pred_region
      _
    $region45: #{vae_forward.1} parent=1 // pred_fallthru
      _
    // Predicated region
    $region46: #{vae_forward.1} parent=1 // pred_check
      _
    $region47: #{vae_forward.1} parent=1 // pred_check_branch
      %2574 = sbr.rel (0) target = $region49
    $region48: #{vae_forward.1} parent=1 // pred_region
      _
    $region49: #{vae_forward.1} parent=1 // pred_fallthru
      _
    // Predicated region
    $region50: #{vae_forward.1} parent=1 // pred_check
      _
    $region51: #{vae_forward.1} parent=1 // pred_check_branch
      %2576 = sbr.rel (0) target = $region53
    $region52: #{vae_forward.1} parent=1 // pred_region
      _
    $region53: #{vae_forward.1} parent=1 // pred_fallthru
      _
    %2577 = vsyncpa [#allocation3], 1

</llo_original>
